<compile_context>
chip_gen: v7x
topology: tpu7x:2x2x1
jax: 0.10.0
libtpu: 0.0.40
codegen_flags: <defaults>
</compile_context>

<pallas_src>
import jax
import jax.numpy as jnp
from jax import lax
from jax.experimental import pallas as pl
from jax.experimental.pallas import tpu as pltpu
import numpy as np

_VMEM_LIMIT = 48 * 1024 * 1024  # raise scoped VMEM limit (v5e default is only 16 MiB)


def _round_up(x, m):
    return ((x + m - 1) // m) * m


def _pad_to(x, shape):
    pads = [(0, s - d) for d, s in zip(x.shape, shape)]
    if all(p == (0, 0) for p in pads):
        return x
    return jnp.pad(x, pads)


# --------------------------------------------------------------------------
# Generic tiled matmul + bias:  out = X @ W + b   (f32 accumulation, f32 out)
# Used for the x @ W_ih precompute and the hs @ W_out vocab projection.
# --------------------------------------------------------------------------
def _matmul_bias_kernel(x_ref, w_ref, b_ref, o_ref, acc_ref):
    @pl.when(pl.program_id(2) == 0)
    def _():
        acc_ref[...] = jnp.zeros_like(acc_ref)

    acc_ref[...] += jnp.dot(x_ref[...], w_ref[...],
                            preferred_element_type=jnp.float32)

    @pl.when(pl.program_id(2) == pl.num_programs(2) - 1)
    def _():
        o_ref[...] = (acc_ref[...] + b_ref[...]).astype(o_ref.dtype)


def matmul_bias(x, w, b, *, mxu_dtype=jnp.bfloat16, out_dtype=jnp.float32):
    M, K = x.shape
    K2, N = w.shape
    assert K == K2
    b = b.reshape(1, N).astype(jnp.float32)

    sub = 16 if mxu_dtype == jnp.bfloat16 else 8
    tm = min(256, _round_up(M, sub))
    tn = min(256, _round_up(N, 128))
    tk = min(512, _round_up(K, 128))
    Mp, Kp, Np = _round_up(M, tm), _round_up(K, tk), _round_up(N, tn)

    xp = _pad_to(x.astype(mxu_dtype), (Mp, Kp))
    wp = _pad_to(w.astype(mxu_dtype), (Kp, Np))
    bp = _pad_to(b, (1, Np))

    out = pl.pallas_call(
        _matmul_bias_kernel,
        out_shape=jax.ShapeDtypeStruct((Mp, Np), out_dtype),
        grid_spec=pltpu.PrefetchScalarGridSpec(
            num_scalar_prefetch=0,
            grid=(Mp // tm, Np // tn, Kp // tk),
            in_specs=[pl.BlockSpec((tm, tk), lambda i, j, k: (i, k)),
                      pl.BlockSpec((tk, tn), lambda i, j, k: (k, j)),
                      pl.BlockSpec((1, tn), lambda i, j, k: (0, j))],
            out_specs=pl.BlockSpec((tm, tn), lambda i, j, k: (i, j)),
            scratch_shapes=[pltpu.VMEM((tm, tn), jnp.float32)]),
        compiler_params=pltpu.CompilerParams(
            dimension_semantics=("parallel", "parallel", "arbitrary"),
            vmem_limit_bytes=_VMEM_LIMIT),
    )(xp, wp, bp)
    return out[:M, :N]


# --------------------------------------------------------------------------
# Serial LSTM recurrence.  gates_x already contains x@W_ih + (b_ih + b_hh),
# so each step is a single (B, H) @ (H, 4H) matmul plus activations.
# The grid streams chunks of Tc timesteps (x-gates in, hidden states out);
# h/c persist across chunks in VMEM scratch and live in vregs inside a chunk.
# --------------------------------------------------------------------------
def _lstm_recurrence_kernel(gx_ref, whh_ref, hs_ref, h_ref, c_ref):
    # gx_ref : (Tc, Bp, 4H) f32   precomputed x@W_ih + bias for this chunk
    # whh_ref: (H, 4H)            recurrent weights (resident across chunks)
    # hs_ref : (Tc, Bp, H) f32    hidden-state outputs
    # h_ref, c_ref : (Bp, H) f32  scratch carrying state across grid steps
    Tc = gx_ref.shape[0]
    H = h_ref.shape[-1]

    @pl.when(pl.program_id(0) == 0)
    def _():
        h_ref[...] = jnp.zeros_like(h_ref)
        c_ref[...] = jnp.zeros_like(c_ref)

    w_hh = whh_ref[...]  # load once per chunk

    def step(t, carry):
        h, c = carry
        gates = gx_ref[t] + jnp.dot(h.astype(w_hh.dtype), w_hh,
                                    preferred_element_type=jnp.float32)
        # NOTE: choose H as a multiple of 128 so these gate slices are lane-aligned.
        i_g = jax.nn.sigmoid(gates[:, 0 * H:1 * H])
        f_g = jax.nn.sigmoid(gates[:, 1 * H:2 * H])
        g_g = jnp.tanh(gates[:, 2 * H:3 * H])
        o_g = jax.nn.sigmoid(gates[:, 3 * H:4 * H])
        c_new = f_g * c + i_g * g_g
        h_new = o_g * jnp.tanh(c_new)
        hs_ref[t] = h_new
        return (h_new, c_new)

    h_fin, c_fin = lax.fori_loop(0, Tc, step, (h_ref[...], c_ref[...]),
                                 unroll=True)
    h_ref[...] = h_fin
    c_ref[...] = c_fin


def lstm_recurrence(gates_x, w_hh, *, mxu_dtype=jnp.bfloat16, chunk=16):
    T, Bp, G = gates_x.shape
    H = w_hh.shape[0]
    Tc = min(T, chunk)
    Tp = _round_up(T, Tc)
    gates_x = _pad_to(gates_x, (Tp, Bp, G))

    hs = pl.pallas_call(
        _lstm_recurrence_kernel,
        out_shape=jax.ShapeDtypeStruct((Tp, Bp, H), jnp.float32),
        grid_spec=pltpu.PrefetchScalarGridSpec(
            num_scalar_prefetch=0,
            grid=(Tp // Tc,),
            in_specs=[pl.BlockSpec((Tc, Bp, G), lambda t: (t, 0, 0)),
                      pl.BlockSpec((H, G), lambda t: (0, 0))],
            out_specs=pl.BlockSpec((Tc, Bp, H), lambda t: (t, 0, 0)),
            scratch_shapes=[pltpu.VMEM((Bp, H), jnp.float32),   # h
                            pltpu.VMEM((Bp, H), jnp.float32)]),  # c
        compiler_params=pltpu.CompilerParams(
            dimension_semantics=("arbitrary",),
            vmem_limit_bytes=_VMEM_LIMIT),
    )(gates_x, w_hh.astype(mxu_dtype))
    return hs[:T]


# --------------------------------------------------------------------------
# DecoderRNN.forward
# --------------------------------------------------------------------------
def decoder_rnn_forward(features, captions, params, *, mxu_dtype=jnp.bfloat16):
    """features: (B, E) f32, captions: (B, L) int32 -> logits (B, L, V) f32."""
    emb = params["embedding"]            # (V, E)
    w_ih = params["w_ih"]                # (E, 4H)  (transposed vs PyTorch)
    w_hh = params["w_hh"]                # (H, 4H)
    b = params["b"]                      # (1, 4H)  bias_ih + bias_hh
    w_out = params["w_out"]              # (H, V)
    b_out = params["b_out"]              # (1, V)

    B, E = features.shape
    H = w_hh.shape[0]
    V = w_out.shape[1]

    # Glue: embedding gather + concat, plain JAX (no Pallas win for a gather here).
    cap_emb = jnp.take(emb, captions[:, :-1], axis=0)                   # (B, L-1, E)
    inputs = jnp.concatenate([features[:, None, :], cap_emb], axis=1)   # (B, T, E)
    T = inputs.shape[1]

    # Pad batch to >= 8 sublanes, go time-major for the recurrence.
    Bp = max(8, _round_up(B, 8))
    x_tm = jnp.transpose(_pad_to(inputs, (Bp, T, E)), (1, 0, 2))        # (T, Bp, E)

    # 1) Input gate contributions + bias: one big matmul over all timesteps.
    gx = matmul_bias(x_tm.reshape(T * Bp, E), w_ih, b, mxu_dtype=mxu_dtype)
    gx = gx.reshape(T, Bp, 4 * H)

    # 2) Serial recurrence (only h @ W_hh per step).
    hs = lstm_recurrence(gx, w_hh, mxu_dtype=mxu_dtype)                 # (T, Bp, H)

    # 3) Vocab projection: one big tiled, megacore-parallel matmul.
    logits = matmul_bias(hs.reshape(T * Bp, H), w_out, b_out, mxu_dtype=mxu_dtype)
    logits = logits.reshape(T, Bp, V)
    return jnp.transpose(logits, (1, 0, 2))[:B]                         # (B, T, V)

    # TODO(synk): greedy `sample()` decoding loop (data-dependent argmax feedback) not ported.


# --------------------------------------------------------------------------
# Pure-JAX reference with identical math / casting for validation.
# --------------------------------------------------------------------------
def _reference_forward(features, captions, params, *, mxu_dtype=jnp.bfloat16):
    emb = params["embedding"]
    cap_emb = jnp.take(emb, captions[:, :-1], axis=0)
    inputs = jnp.concatenate([features[:, None, :], cap_emb], axis=1)   # (B, T, E)
    B, T, E = inputs.shape
    H = params["w_hh"].shape[0]
    V = params["w_out"].shape[1]

    w_ih = params["w_ih"].astype(mxu_dtype)
    w_hh = params["w_hh"].astype(mxu_dtype)
    w_out = params["w_out"].astype(mxu_dtype)

    gx = jnp.dot(inputs.astype(mxu_dtype).reshape(B * T, E), w_ih,
                 preferred_element_type=jnp.float32).reshape(B, T, 4 * H)
    gx = gx + params["b"][0]

    def step(carry, gx_t):
        h, c = carry
        gates = gx_t + jnp.dot(h.astype(mxu_dtype), w_hh,
                               preferred_element_type=jnp.float32)
        i_g = jax.nn.sigmoid(gates[:, 0 * H:1 * H])
        f_g = jax.nn.sigmoid(gates[:, 1 * H:2 * H])
        g_g = jnp.tanh(gates[:, 2 * H:3 * H])
        o_g = jax.nn.sigmoid(gates[:, 3 * H:4 * H])
        c = f_g * c + i_g * g_g
        h = o_g * jnp.tanh(c)
        return (h, c), h

    h0 = jnp.zeros((B, H), jnp.float32)
    c0 = jnp.zeros((B, H), jnp.float32)
    _, hs = lax.scan(step, (h0, c0), jnp.transpose(gx, (1, 0, 2)))
    hs = jnp.transpose(hs, (1, 0, 2))                                    # (B, T, H)
    logits = jnp.dot(hs.astype(mxu_dtype).reshape(B * T, H), w_out,
                     preferred_element_type=jnp.float32).reshape(B, T, V)
    return logits + params["b_out"][0]


def init_params(key, embed_size, hidden_size, vocab_size):
    ks = jax.random.split(key, 6)
    scale = 0.1
    return {
        "embedding": scale * jax.random.normal(ks[0], (vocab_size, embed_size), jnp.float32),
        # stored transposed vs. PyTorch weight_ih_l0 (4H, E) / weight_hh_l0 (4H, H)
        "w_ih": scale * jax.random.normal(ks[1], (embed_size, 4 * hidden_size), jnp.float32),
        "w_hh": scale * jax.random.normal(ks[2], (hidden_size, 4 * hidden_size), jnp.float32),
        # bias = bias_ih + bias_hh combined
        "b": scale * jax.random.normal(ks[3], (1, 4 * hidden_size), jnp.float32),
        "w_out": scale * jax.random.normal(ks[4], (hidden_size, vocab_size), jnp.float32),
        "b_out": scale * jax.random.normal(ks[5], (1, vocab_size), jnp.float32),
    }


if __name__ == "__main__":
    B, L = 2, 8                                   # batch, caption length (T = L steps)
    embed_size, hidden_size, vocab_size = 64, 128, 256   # H multiple of 128 -> aligned gates

    key = jax.random.PRNGKey(0)
    k_feat, k_cap, k_par = jax.random.split(key, 3)
    params = init_params(k_par, embed_size, hidden_size, vocab_size)

    features = jax.random.normal(k_feat, (B, embed_size), jnp.float32)
    captions = jax.random.randint(k_cap, (B, L), 0, vocab_size, jnp.int32)

    fwd = jax.jit(lambda f, c: decoder_rnn_forward(f, c, params))
    out = jax.block_until_ready(fwd(features, captions))

    ref = jax.block_until_ready(_reference_forward(features, captions, params))
    assert out.shape == (B, L, vocab_size), out.shape
    np.testing.assert_allclose(np.asarray(out), np.asarray(ref), rtol=1e-3, atol=1e-3)

    print("KERNEL_OK")
</pallas_src>

<mosaic_0001>
module attributes {stable_mosaic.version = 11 : i64} {
  func.func @_matmul_bias_kernel(%arg0: i32, %arg1: i32, %arg2: i32, %arg3: memref<64x128xbf16, #tpu.memory_space<vmem>>, %arg4: memref<128x256xbf16, #tpu.memory_space<vmem>>, %arg5: memref<1x256xf32, #tpu.memory_space<vmem>>, %arg6: memref<64x256xf32, #tpu.memory_space<vmem>>, %arg7: memref<64x256xf32, #tpu.memory_space<vmem>>) attributes {dimension_semantics = [#tpu.dimension_semantics<parallel>, #tpu.dimension_semantics<parallel>, #tpu.dimension_semantics<arbitrary>], iteration_bounds = array<i64: 1, 2, 1>, scalar_prefetch = 0 : i64, scratch_operands = 1 : i64, tpu.core_type = #tpu.core_type<tc>, window_params = [{transform_indices = @transform_0, window_bounds = array<i64: 64, 128>}, {transform_indices = @transform_1, window_bounds = array<i64: 128, 256>}, {transform_indices = @transform_2, window_bounds = array<i64: 1, 256>}, {transform_indices = @transform_3, window_bounds = array<i64: 64, 256>}]} {
    %c0_i32 = arith.constant 0 : i32
    %0 = arith.cmpi eq, %arg2, %c0_i32 : i32
    %1 = arith.extui %0 : i1 to i32
    %c0_i32_0 = arith.constant 0 : i32
    %2 = arith.cmpi ne, %1, %c0_i32_0 : i32
    scf.if %2 {
      %cst_10 = arith.constant 0.000000e+00 : f32
      %12 = vector.broadcast %cst_10 : f32 to vector<64x256xf32>
      %c0_11 = arith.constant 0 : index
      %c0_12 = arith.constant 0 : index
      %13 = vector.load %arg7[%c0_11, %c0_12] : memref<64x256xf32, #tpu.memory_space<vmem>>, vector<64x256xf32>
      tpu.vector_store %arg7[%c0_11, %c0_12], %12 {strides = array<i32>} : memref<64x256xf32, #tpu.memory_space<vmem>>, vector<64x256xf32>,
    } else {
    }
    %c0 = arith.constant 0 : index
    %c0_1 = arith.constant 0 : index
    %3 = vector.load %arg7[%c0, %c0_1] : memref<64x256xf32, #tpu.memory_space<vmem>>, vector<64x256xf32>
    %c0_2 = arith.constant 0 : index
    %c0_3 = arith.constant 0 : index
    %4 = vector.load %arg3[%c0_2, %c0_3] : memref<64x128xbf16, #tpu.memory_space<vmem>>, vector<64x128xbf16>
    %c0_4 = arith.constant 0 : index
    %c0_5 = arith.constant 0 : index
    %5 = vector.load %arg4[%c0_4, %c0_5] : memref<128x256xbf16, #tpu.memory_space<vmem>>, vector<128x256xbf16>
    %cst = arith.constant dense<0.000000e+00> : vector<64x256xf32>
    %6 = tpu.matmul %4, %5, %cst {dimension_numbers = #tpu.dot_dimension_numbers<[1], [0], [0], [1], [0, 0, 1, 1], [], []>} : vector<64x128xbf16>, vector<128x256xbf16>, vector<64x256xf32> -> vector<64x256xf32>
    %7 = arith.addf %3, %6 : vector<64x256xf32>
    %c0_6 = arith.constant 0 : index
    %c0_7 = arith.constant 0 : index
    %8 = vector.load %arg7[%c0_6, %c0_7] : memref<64x256xf32, #tpu.memory_space<vmem>>, vector<64x256xf32>
    tpu.vector_store %arg7[%c0_6, %c0_7], %7 {strides = array<i32>} : memref<64x256xf32, #tpu.memory_space<vmem>>, vector<64x256xf32>,
    %c0_i32_8 = arith.constant 0 : i32
    %9 = arith.cmpi eq, %arg2, %c0_i32_8 : i32
    %10 = arith.extui %9 : i1 to i32
    %c0_i32_9 = arith.constant 0 : i32
    %11 = arith.cmpi ne, %10, %c0_i32_9 : i32
    scf.if %11 {
      %c0_10 = arith.constant 0 : index
      %c0_11 = arith.constant 0 : index
      %12 = vector.load %arg7[%c0_10, %c0_11] : memref<64x256xf32, #tpu.memory_space<vmem>>, vector<64x256xf32>
      %c0_12 = arith.constant 0 : index
      %c0_13 = arith.constant 0 : index
      %13 = vector.load %arg5[%c0_12, %c0_13] : memref<1x256xf32, #tpu.memory_space<vmem>>, vector<1x256xf32>
      %14 = vector.broadcast %13 : vector<1x256xf32> to vector<64x256xf32>
      %15 = arith.addf %12, %14 : vector<64x256xf32>
      %c0_14 = arith.constant 0 : index
      %c0_15 = arith.constant 0 : index
      %16 = vector.load %arg6[%c0_14, %c0_15] : memref<64x256xf32, #tpu.memory_space<vmem>>, vector<64x256xf32>
      tpu.vector_store %arg6[%c0_14, %c0_15], %15 {strides = array<i32>} : memref<64x256xf32, #tpu.memory_space<vmem>>, vector<64x256xf32>,
    } else {
    }
    return
  }
  func.func @transform_0(%arg0: i32, %arg1: i32, %arg2: i32) -> (i32, i32) {
    %c0_i32 = arith.constant 0 : i32
    return %arg0, %arg2 : i32, i32
  }
  func.func @transform_1(%arg0: i32, %arg1: i32, %arg2: i32) -> (i32, i32) {
    %c0_i32 = arith.constant 0 : i32
    return %arg2, %arg1 : i32, i32
  }
  func.func @transform_2(%arg0: i32, %arg1: i32, %arg2: i32) -> (i32, i32) {
    %c0_i32 = arith.constant 0 : i32
    %c0_i32_0 = arith.constant 0 : i32
    return %c0_i32, %arg1 : i32, i32
  }
  func.func @transform_3(%arg0: i32, %arg1: i32, %arg2: i32) -> (i32, i32) {
    %c0_i32 = arith.constant 0 : i32
    return %arg0, %arg1 : i32, i32
  }
}

module attributes {stable_mosaic.version = 11 : i64} {
  func.func @_lstm_recurrence_kernel(%arg0: i32, %arg1: memref<8x8x512xf32, #tpu.memory_space<vmem>>, %arg2: memref<128x512xbf16, #tpu.memory_space<vmem>>, %arg3: memref<8x8x128xf32, #tpu.memory_space<vmem>>, %arg4: memref<8x128xf32, #tpu.memory_space<vmem>>, %arg5: memref<8x128xf32, #tpu.memory_space<vmem>>) attributes {dimension_semantics = [#tpu.dimension_semantics<arbitrary>], iteration_bounds = array<i64: 1>, scalar_prefetch = 0 : i64, scratch_operands = 2 : i64, tpu.core_type = #tpu.core_type<tc>, window_params = [{transform_indices = @transform_0, window_bounds = array<i64: 8, 8, 512>}, {pipeline_mode = #tpu.pipeline_mode<synchronous>, transform_indices = @transform_1, window_bounds = array<i64: 128, 512>}, {transform_indices = @transform_2, window_bounds = array<i64: 8, 8, 128>}]} {
    %c0_i32 = arith.constant 0 : i32
    %0 = arith.cmpi eq, %arg0, %c0_i32 : i32
    %1 = arith.extui %0 : i1 to i32
    %c0_i32_0 = arith.constant 0 : i32
    %2 = arith.cmpi ne, %1, %c0_i32_0 : i32
    scf.if %2 {
      %cst_74 = arith.constant 0.000000e+00 : f32
      %288 = vector.broadcast %cst_74 : f32 to vector<8x128xf32>
      %c0_75 = arith.constant 0 : index
      %c0_76 = arith.constant 0 : index
      %289 = vector.load %arg4[%c0_75, %c0_76] : memref<8x128xf32, #tpu.memory_space<vmem>>, vector<8x128xf32>
      tpu.vector_store %arg4[%c0_75, %c0_76], %288 {strides = array<i32>} : memref<8x128xf32, #tpu.memory_space<vmem>>, vector<8x128xf32>,
      %cst_77 = arith.constant 0.000000e+00 : f32
      %290 = vector.broadcast %cst_77 : f32 to vector<8x128xf32>
      %c0_78 = arith.constant 0 : index
      %c0_79 = arith.constant 0 : index
      %291 = vector.load %arg5[%c0_78, %c0_79] : memref<8x128xf32, #tpu.memory_space<vmem>>, vector<8x128xf32>
      tpu.vector_store %arg5[%c0_78, %c0_79], %290 {strides = array<i32>} : memref<8x128xf32, #tpu.memory_space<vmem>>, vector<8x128xf32>,
    } else {
    }
    %c0 = arith.constant 0 : index
    %c0_1 = arith.constant 0 : index
    %3 = vector.load %arg2[%c0, %c0_1] : memref<128x512xbf16, #tpu.memory_space<vmem>>, vector<128x512xbf16>
    %c0_2 = arith.constant 0 : index
    %c0_3 = arith.constant 0 : index
    %4 = vector.load %arg4[%c0_2, %c0_3] : memref<8x128xf32, #tpu.memory_space<vmem>>, vector<8x128xf32>
    %c0_4 = arith.constant 0 : index
    %c0_5 = arith.constant 0 : index
    %5 = vector.load %arg5[%c0_4, %c0_5] : memref<8x128xf32, #tpu.memory_space<vmem>>, vector<8x128xf32>
    %c0_i32_6 = arith.constant 0 : i32
    %6 = arith.index_cast %c0_i32_6 : i32 to index
    %c0_7 = arith.constant 0 : index
    %c0_8 = arith.constant 0 : index
    %7 = vector.load %arg1[%6, %c0_7, %c0_8] : memref<8x8x512xf32, #tpu.memory_space<vmem>>, vector<1x8x512xf32>
    %8 = vector.shape_cast %7 : vector<1x8x512xf32> to vector<8x512xf32>
    %9 = arith.truncf %4 : vector<8x128xf32> to vector<8x128xbf16>
    %cst = arith.constant dense<0.000000e+00> : vector<8x512xf32>
    %10 = tpu.matmul %9, %3, %cst {dimension_numbers = #tpu.dot_dimension_numbers<[1], [0], [0], [1], [0, 0, 1, 1], [], []>} : vector<8x128xbf16>, vector<128x512xbf16>, vector<8x512xf32> -> vector<8x512xf32>
    %11 = arith.addf %8, %10 : vector<8x512xf32>
    %12 = vector.extract_strided_slice %11 {offsets = [0, 0], sizes = [8, 128], strides = [1, 1]} : vector<8x512xf32> to vector<8x128xf32>
    %13 = arith.negf %12 : vector<8x128xf32>
    %14 = math.exp %13 : vector<8x128xf32>
    %cst_9 = arith.constant 1.000000e+00 : f32
    %15 = vector.broadcast %cst_9 : f32 to vector<8x128xf32>
    %16 = arith.addf %15, %14 : vector<8x128xf32>
    %17 = arith.divf %15, %16 : vector<8x128xf32>
    %18 = vector.extract_strided_slice %11 {offsets = [0, 128], sizes = [8, 128], strides = [1, 1]} : vector<8x512xf32> to vector<8x128xf32>
    %19 = arith.negf %18 : vector<8x128xf32>
    %20 = math.exp %19 : vector<8x128xf32>
    %cst_10 = arith.constant 1.000000e+00 : f32
    %21 = vector.broadcast %cst_10 : f32 to vector<8x128xf32>
    %22 = arith.addf %21, %20 : vector<8x128xf32>
    %23 = arith.divf %21, %22 : vector<8x128xf32>
    %24 = vector.extract_strided_slice %11 {offsets = [0, 256], sizes = [8, 128], strides = [1, 1]} : vector<8x512xf32> to vector<8x128xf32>
    %25 = math.tanh %24 : vector<8x128xf32>
    %26 = vector.extract_strided_slice %11 {offsets = [0, 384], sizes = [8, 128], strides = [1, 1]} : vector<8x512xf32> to vector<8x128xf32>
    %27 = arith.negf %26 : vector<8x128xf32>
    %28 = math.exp %27 : vector<8x128xf32>
    %cst_11 = arith.constant 1.000000e+00 : f32
    %29 = vector.broadcast %cst_11 : f32 to vector<8x128xf32>
    %30 = arith.addf %29, %28 : vector<8x128xf32>
    %31 = arith.divf %29, %30 : vector<8x128xf32>
    %32 = arith.mulf %23, %5 : vector<8x128xf32>
    %33 = arith.mulf %17, %25 : vector<8x128xf32>
    %34 = arith.addf %32, %33 : vector<8x128xf32>
    %35 = math.tanh %34 : vector<8x128xf32>
    %36 = arith.mulf %31, %35 : vector<8x128xf32>
    %37 = arith.index_cast %c0_i32_6 : i32 to index
    %c0_12 = arith.constant 0 : index
    %c0_13 = arith.constant 0 : index
    %38 = vector.load %arg3[%37, %c0_12, %c0_13] : memref<8x8x128xf32, #tpu.memory_space<vmem>>, vector<1x8x128xf32>
    %39 = vector.shape_cast %38 : vector<1x8x128xf32> to vector<8x128xf32>
    %40 = vector.shape_cast %36 : vector<8x128xf32> to vector<1x8x128xf32>
    tpu.vector_store %arg3[%37, %c0_12, %c0_13], %40 {strides = array<i32>} : memref<8x8x128xf32, #tpu.memory_space<vmem>>, vector<1x8x128xf32>,
    %c1_i32 = arith.constant 1 : i32
    %41 = arith.index_cast %c1_i32 : i32 to index
    %c0_14 = arith.constant 0 : index
    %c0_15 = arith.constant 0 : index
    %42 = vector.load %arg1[%41, %c0_14, %c0_15] : memref<8x8x512xf32, #tpu.memory_space<vmem>>, vector<1x8x512xf32>
    %43 = vector.shape_cast %42 : vector<1x8x512xf32> to vector<8x512xf32>
    %44 = arith.truncf %36 : vector<8x128xf32> to vector<8x128xbf16>
    %cst_16 = arith.constant dense<0.000000e+00> : vector<8x512xf32>
    %45 = tpu.matmul %44, %3, %cst_16 {dimension_numbers = #tpu.dot_dimension_numbers<[1], [0], [0], [1], [0, 0, 1, 1], [], []>} : vector<8x128xbf16>, vector<128x512xbf16>, vector<8x512xf32> -> vector<8x512xf32>
    %46 = arith.addf %43, %45 : vector<8x512xf32>
    %47 = vector.extract_strided_slice %46 {offsets = [0, 0], sizes = [8, 128], strides = [1, 1]} : vector<8x512xf32> to vector<8x128xf32>
    %48 = arith.negf %47 : vector<8x128xf32>
    %49 = math.exp %48 : vector<8x128xf32>
    %cst_17 = arith.constant 1.000000e+00 : f32
    %50 = vector.broadcast %cst_17 : f32 to vector<8x128xf32>
    %51 = arith.addf %50, %49 : vector<8x128xf32>
    %52 = arith.divf %50, %51 : vector<8x128xf32>
    %53 = vector.extract_strided_slice %46 {offsets = [0, 128], sizes = [8, 128], strides = [1, 1]} : vector<8x512xf32> to vector<8x128xf32>
    %54 = arith.negf %53 : vector<8x128xf32>
    %55 = math.exp %54 : vector<8x128xf32>
    %cst_18 = arith.constant 1.000000e+00 : f32
    %56 = vector.broadcast %cst_18 : f32 to vector<8x128xf32>
    %57 = arith.addf %56, %55 : vector<8x128xf32>
    %58 = arith.divf %56, %57 : vector<8x128xf32>
    %59 = vector.extract_strided_slice %46 {offsets = [0, 256], sizes = [8, 128], strides = [1, 1]} : vector<8x512xf32> to vector<8x128xf32>
    %60 = math.tanh %59 : vector<8x128xf32>
    %61 = vector.extract_strided_slice %46 {offsets = [0, 384], sizes = [8, 128], strides = [1, 1]} : vector<8x512xf32> to vector<8x128xf32>
    %62 = arith.negf %61 : vector<8x128xf32>
    %63 = math.exp %62 : vector<8x128xf32>
    %cst_19 = arith.constant 1.000000e+00 : f32
    %64 = vector.broadcast %cst_19 : f32 to vector<8x128xf32>
    %65 = arith.addf %64, %63 : vector<8x128xf32>
    %66 = arith.divf %64, %65 : vector<8x128xf32>
    %67 = arith.mulf %58, %34 : vector<8x128xf32>
    %68 = arith.mulf %52, %60 : vector<8x128xf32>
    %69 = arith.addf %67, %68 : vector<8x128xf32>
    %70 = math.tanh %69 : vector<8x128xf32>
    %71 = arith.mulf %66, %70 : vector<8x128xf32>
    %72 = arith.index_cast %c1_i32 : i32 to index
    %c0_20 = arith.constant 0 : index
    %c0_21 = arith.constant 0 : index
    %73 = vector.load %arg3[%72, %c0_20, %c0_21] : memref<8x8x128xf32, #tpu.memory_space<vmem>>, vector<1x8x128xf32>
    %74 = vector.shape_cast %73 : vector<1x8x128xf32> to vector<8x128xf32>
    %75 = vector.shape_cast %71 : vector<8x128xf32> to vector<1x8x128xf32>
    tpu.vector_store %arg3[%72, %c0_20, %c0_21], %75 {strides = array<i32>} : memref<8x8x128xf32, #tpu.memory_space<vmem>>, vector<1x8x128xf32>,
    %c2_i32 = arith.constant 2 : i32
    %76 = arith.index_cast %c2_i32 : i32 to index
    %c0_22 = arith.constant 0 : index
    %c0_23 = arith.constant 0 : index
    %77 = vector.load %arg1[%76, %c0_22, %c0_23] : memref<8x8x512xf32, #tpu.memory_space<vmem>>, vector<1x8x512xf32>
    %78 = vector.shape_cast %77 : vector<1x8x512xf32> to vector<8x512xf32>
    %79 = arith.truncf %71 : vector<8x128xf32> to vector<8x128xbf16>
    %cst_24 = arith.constant dense<0.000000e+00> : vector<8x512xf32>
    %80 = tpu.matmul %79, %3, %cst_24 {dimension_numbers = #tpu.dot_dimension_numbers<[1], [0], [0], [1], [0, 0, 1, 1], [], []>} : vector<8x128xbf16>, vector<128x512xbf16>, vector<8x512xf32> -> vector<8x512xf32>
    %81 = arith.addf %78, %80 : vector<8x512xf32>
    %82 = vector.extract_strided_slice %81 {offsets = [0, 0], sizes = [8, 128], strides = [1, 1]} : vector<8x512xf32> to vector<8x128xf32>
    %83 = arith.negf %82 : vector<8x128xf32>
    %84 = math.exp %83 : vector<8x128xf32>
    %cst_25 = arith.constant 1.000000e+00 : f32
    %85 = vector.broadcast %cst_25 : f32 to vector<8x128xf32>
    %86 = arith.addf %85, %84 : vector<8x128xf32>
    %87 = arith.divf %85, %86 : vector<8x128xf32>
    %88 = vector.extract_strided_slice %81 {offsets = [0, 128], sizes = [8, 128], strides = [1, 1]} : vector<8x512xf32> to vector<8x128xf32>
    %89 = arith.negf %88 : vector<8x128xf32>
    %90 = math.exp %89 : vector<8x128xf32>
    %cst_26 = arith.constant 1.000000e+00 : f32
    %91 = vector.broadcast %cst_26 : f32 to vector<8x128xf32>
    %92 = arith.addf %91, %90 : vector<8x128xf32>
    %93 = arith.divf %91, %92 : vector<8x128xf32>
    %94 = vector.extract_strided_slice %81 {offsets = [0, 256], sizes = [8, 128], strides = [1, 1]} : vector<8x512xf32> to vector<8x128xf32>
    %95 = math.tanh %94 : vector<8x128xf32>
    %96 = vector.extract_strided_slice %81 {offsets = [0, 384], sizes = [8, 128], strides = [1, 1]} : vector<8x512xf32> to vector<8x128xf32>
    %97 = arith.negf %96 : vector<8x128xf32>
    %98 = math.exp %97 : vector<8x128xf32>
    %cst_27 = arith.constant 1.000000e+00 : f32
    %99 = vector.broadcast %cst_27 : f32 to vector<8x128xf32>
    %100 = arith.addf %99, %98 : vector<8x128xf32>
    %101 = arith.divf %99, %100 : vector<8x128xf32>
    %102 = arith.mulf %93, %69 : vector<8x128xf32>
    %103 = arith.mulf %87, %95 : vector<8x128xf32>
    %104 = arith.addf %102, %103 : vector<8x128xf32>
    %105 = math.tanh %104 : vector<8x128xf32>
    %106 = arith.mulf %101, %105 : vector<8x128xf32>
    %107 = arith.index_cast %c2_i32 : i32 to index
    %c0_28 = arith.constant 0 : index
    %c0_29 = arith.constant 0 : index
    %108 = vector.load %arg3[%107, %c0_28, %c0_29] : memref<8x8x128xf32, #tpu.memory_space<vmem>>, vector<1x8x128xf32>
    %109 = vector.shape_cast %108 : vector<1x8x128xf32> to vector<8x128xf32>
    %110 = vector.shape_cast %106 : vector<8x128xf32> to vector<1x8x128xf32>
    tpu.vector_store %arg3[%107, %c0_28, %c0_29], %110 {strides = array<i32>} : memref<8x8x128xf32, #tpu.memory_space<vmem>>, vector<1x8x128xf32>,
    %c3_i32 = arith.constant 3 : i32
    %111 = arith.index_cast %c3_i32 : i32 to index
    %c0_30 = arith.constant 0 : index
    %c0_31 = arith.constant 0 : index
    %112 = vector.load %arg1[%111, %c0_30, %c0_31] : memref<8x8x512xf32, #tpu.memory_space<vmem>>, vector<1x8x512xf32>
    %113 = vector.shape_cast %112 : vector<1x8x512xf32> to vector<8x512xf32>
    %114 = arith.truncf %106 : vector<8x128xf32> to vector<8x128xbf16>
    %cst_32 = arith.constant dense<0.000000e+00> : vector<8x512xf32>
    %115 = tpu.matmul %114, %3, %cst_32 {dimension_numbers = #tpu.dot_dimension_numbers<[1], [0], [0], [1], [0, 0, 1, 1], [], []>} : vector<8x128xbf16>, vector<128x512xbf16>, vector<8x512xf32> -> vector<8x512xf32>
    %116 = arith.addf %113, %115 : vector<8x512xf32>
    %117 = vector.extract_strided_slice %116 {offsets = [0, 0], sizes = [8, 128], strides = [1, 1]} : vector<8x512xf32> to vector<8x128xf32>
    %118 = arith.negf %117 : vector<8x128xf32>
    %119 = math.exp %118 : vector<8x128xf32>
    %cst_33 = arith.constant 1.000000e+00 : f32
    %120 = vector.broadcast %cst_33 : f32 to vector<8x128xf32>
    %121 = arith.addf %120, %119 : vector<8x128xf32>
    %122 = arith.divf %120, %121 : vector<8x128xf32>
    %123 = vector.extract_strided_slice %116 {offsets = [0, 128], sizes = [8, 128], strides = [1, 1]} : vector<8x512xf32> to vector<8x128xf32>
    %124 = arith.negf %123 : vector<8x128xf32>
    %125 = math.exp %124 : vector<8x128xf32>
    %cst_34 = arith.constant 1.000000e+00 : f32
    %126 = vector.broadcast %cst_34 : f32 to vector<8x128xf32>
    %127 = arith.addf %126, %125 : vector<8x128xf32>
    %128 = arith.divf %126, %127 : vector<8x128xf32>
    %129 = vector.extract_strided_slice %116 {offsets = [0, 256], sizes = [8, 128], strides = [1, 1]} : vector<8x512xf32> to vector<8x128xf32>
    %130 = math.tanh %129 : vector<8x128xf32>
    %131 = vector.extract_strided_slice %116 {offsets = [0, 384], sizes = [8, 128], strides = [1, 1]} : vector<8x512xf32> to vector<8x128xf32>
    %132 = arith.negf %131 : vector<8x128xf32>
    %133 = math.exp %132 : vector<8x128xf32>
    %cst_35 = arith.constant 1.000000e+00 : f32
    %134 = vector.broadcast %cst_35 : f32 to vector<8x128xf32>
    %135 = arith.addf %134, %133 : vector<8x128xf32>
    %136 = arith.divf %134, %135 : vector<8x128xf32>
    %137 = arith.mulf %128, %104 : vector<8x128xf32>
    %138 = arith.mulf %122, %130 : vector<8x128xf32>
    %139 = arith.addf %137, %138 : vector<8x128xf32>
    %140 = math.tanh %139 : vector<8x128xf32>
    %141 = arith.mulf %136, %140 : vector<8x128xf32>
    %142 = arith.index_cast %c3_i32 : i32 to index
    %c0_36 = arith.constant 0 : index
    %c0_37 = arith.constant 0 : index
    %143 = vector.load %arg3[%142, %c0_36, %c0_37] : memref<8x8x128xf32, #tpu.memory_space<vmem>>, vector<1x8x128xf32>
    %144 = vector.shape_cast %143 : vector<1x8x128xf32> to vector<8x128xf32>
    %145 = vector.shape_cast %141 : vector<8x128xf32> to vector<1x8x128xf32>
    tpu.vector_store %arg3[%142, %c0_36, %c0_37], %145 {strides = array<i32>} : memref<8x8x128xf32, #tpu.memory_space<vmem>>, vector<1x8x128xf32>,
    %c4_i32 = arith.constant 4 : i32
    %146 = arith.index_cast %c4_i32 : i32 to index
    %c0_38 = arith.constant 0 : index
    %c0_39 = arith.constant 0 : index
    %147 = vector.load %arg1[%146, %c0_38, %c0_39] : memref<8x8x512xf32, #tpu.memory_space<vmem>>, vector<1x8x512xf32>
    %148 = vector.shape_cast %147 : vector<1x8x512xf32> to vector<8x512xf32>
    %149 = arith.truncf %141 : vector<8x128xf32> to vector<8x128xbf16>
    %cst_40 = arith.constant dense<0.000000e+00> : vector<8x512xf32>
    %150 = tpu.matmul %149, %3, %cst_40 {dimension_numbers = #tpu.dot_dimension_numbers<[1], [0], [0], [1], [0, 0, 1, 1], [], []>} : vector<8x128xbf16>, vector<128x512xbf16>, vector<8x512xf32> -> vector<8x512xf32>
    %151 = arith.addf %148, %150 : vector<8x512xf32>
    %152 = vector.extract_strided_slice %151 {offsets = [0, 0], sizes = [8, 128], strides = [1, 1]} : vector<8x512xf32> to vector<8x128xf32>
    %153 = arith.negf %152 : vector<8x128xf32>
    %154 = math.exp %153 : vector<8x128xf32>
    %cst_41 = arith.constant 1.000000e+00 : f32
    %155 = vector.broadcast %cst_41 : f32 to vector<8x128xf32>
    %156 = arith.addf %155, %154 : vector<8x128xf32>
    %157 = arith.divf %155, %156 : vector<8x128xf32>
    %158 = vector.extract_strided_slice %151 {offsets = [0, 128], sizes = [8, 128], strides = [1, 1]} : vector<8x512xf32> to vector<8x128xf32>
    %159 = arith.negf %158 : vector<8x128xf32>
    %160 = math.exp %159 : vector<8x128xf32>
    %cst_42 = arith.constant 1.000000e+00 : f32
    %161 = vector.broadcast %cst_42 : f32 to vector<8x128xf32>
    %162 = arith.addf %161, %160 : vector<8x128xf32>
    %163 = arith.divf %161, %162 : vector<8x128xf32>
    %164 = vector.extract_strided_slice %151 {offsets = [0, 256], sizes = [8, 128], strides = [1, 1]} : vector<8x512xf32> to vector<8x128xf32>
    %165 = math.tanh %164 : vector<8x128xf32>
    %166 = vector.extract_strided_slice %151 {offsets = [0, 384], sizes = [8, 128], strides = [1, 1]} : vector<8x512xf32> to vector<8x128xf32>
    %167 = arith.negf %166 : vector<8x128xf32>
    %168 = math.exp %167 : vector<8x128xf32>
    %cst_43 = arith.constant 1.000000e+00 : f32
    %169 = vector.broadcast %cst_43 : f32 to vector<8x128xf32>
    %170 = arith.addf %169, %168 : vector<8x128xf32>
    %171 = arith.divf %169, %170 : vector<8x128xf32>
    %172 = arith.mulf %163, %139 : vector<8x128xf32>
    %173 = arith.mulf %157, %165 : vector<8x128xf32>
    %174 = arith.addf %172, %173 : vector<8x128xf32>
    %175 = math.tanh %174 : vector<8x128xf32>
    %176 = arith.mulf %171, %175 : vector<8x128xf32>
    %177 = arith.index_cast %c4_i32 : i32 to index
    %c0_44 = arith.constant 0 : index
    %c0_45 = arith.constant 0 : index
    %178 = vector.load %arg3[%177, %c0_44, %c0_45] : memref<8x8x128xf32, #tpu.memory_space<vmem>>, vector<1x8x128xf32>
    %179 = vector.shape_cast %178 : vector<1x8x128xf32> to vector<8x128xf32>
    %180 = vector.shape_cast %176 : vector<8x128xf32> to vector<1x8x128xf32>
    tpu.vector_store %arg3[%177, %c0_44, %c0_45], %180 {strides = array<i32>} : memref<8x8x128xf32, #tpu.memory_space<vmem>>, vector<1x8x128xf32>,
    %c5_i32 = arith.constant 5 : i32
    %181 = arith.index_cast %c5_i32 : i32 to index
    %c0_46 = arith.constant 0 : index
    %c0_47 = arith.constant 0 : index
    %182 = vector.load %arg1[%181, %c0_46, %c0_47] : memref<8x8x512xf32, #tpu.memory_space<vmem>>, vector<1x8x512xf32>
    %183 = vector.shape_cast %182 : vector<1x8x512xf32> to vector<8x512xf32>
    %184 = arith.truncf %176 : vector<8x128xf32> to vector<8x128xbf16>
    %cst_48 = arith.constant dense<0.000000e+00> : vector<8x512xf32>
    %185 = tpu.matmul %184, %3, %cst_48 {dimension_numbers = #tpu.dot_dimension_numbers<[1], [0], [0], [1], [0, 0, 1, 1], [], []>} : vector<8x128xbf16>, vector<128x512xbf16>, vector<8x512xf32> -> vector<8x512xf32>
    %186 = arith.addf %183, %185 : vector<8x512xf32>
    %187 = vector.extract_strided_slice %186 {offsets = [0, 0], sizes = [8, 128], strides = [1, 1]} : vector<8x512xf32> to vector<8x128xf32>
    %188 = arith.negf %187 : vector<8x128xf32>
    %189 = math.exp %188 : vector<8x128xf32>
    %cst_49 = arith.constant 1.000000e+00 : f32
    %190 = vector.broadcast %cst_49 : f32 to vector<8x128xf32>
    %191 = arith.addf %190, %189 : vector<8x128xf32>
    %192 = arith.divf %190, %191 : vector<8x128xf32>
    %193 = vector.extract_strided_slice %186 {offsets = [0, 128], sizes = [8, 128], strides = [1, 1]} : vector<8x512xf32> to vector<8x128xf32>
    %194 = arith.negf %193 : vector<8x128xf32>
    %195 = math.exp %194 : vector<8x128xf32>
    %cst_50 = arith.constant 1.000000e+00 : f32
    %196 = vector.broadcast %cst_50 : f32 to vector<8x128xf32>
    %197 = arith.addf %196, %195 : vector<8x128xf32>
    %198 = arith.divf %196, %197 : vector<8x128xf32>
    %199 = vector.extract_strided_slice %186 {offsets = [0, 256], sizes = [8, 128], strides = [1, 1]} : vector<8x512xf32> to vector<8x128xf32>
    %200 = math.tanh %199 : vector<8x128xf32>
    %201 = vector.extract_strided_slice %186 {offsets = [0, 384], sizes = [8, 128], strides = [1, 1]} : vector<8x512xf32> to vector<8x128xf32>
    %202 = arith.negf %201 : vector<8x128xf32>
    %203 = math.exp %202 : vector<8x128xf32>
    %cst_51 = arith.constant 1.000000e+00 : f32
    %204 = vector.broadcast %cst_51 : f32 to vector<8x128xf32>
    %205 = arith.addf %204, %203 : vector<8x128xf32>
    %206 = arith.divf %204, %205 : vector<8x128xf32>
    %207 = arith.mulf %198, %174 : vector<8x128xf32>
    %208 = arith.mulf %192, %200 : vector<8x128xf32>
    %209 = arith.addf %207, %208 : vector<8x128xf32>
    %210 = math.tanh %209 : vector<8x128xf32>
    %211 = arith.mulf %206, %210 : vector<8x128xf32>
    %212 = arith.index_cast %c5_i32 : i32 to index
    %c0_52 = arith.constant 0 : index
    %c0_53 = arith.constant 0 : index
    %213 = vector.load %arg3[%212, %c0_52, %c0_53] : memref<8x8x128xf32, #tpu.memory_space<vmem>>, vector<1x8x128xf32>
    %214 = vector.shape_cast %213 : vector<1x8x128xf32> to vector<8x128xf32>
    %215 = vector.shape_cast %211 : vector<8x128xf32> to vector<1x8x128xf32>
    tpu.vector_store %arg3[%212, %c0_52, %c0_53], %215 {strides = array<i32>} : memref<8x8x128xf32, #tpu.memory_space<vmem>>, vector<1x8x128xf32>,
    %c6_i32 = arith.constant 6 : i32
    %216 = arith.index_cast %c6_i32 : i32 to index
    %c0_54 = arith.constant 0 : index
    %c0_55 = arith.constant 0 : index
    %217 = vector.load %arg1[%216, %c0_54, %c0_55] : memref<8x8x512xf32, #tpu.memory_space<vmem>>, vector<1x8x512xf32>
    %218 = vector.shape_cast %217 : vector<1x8x512xf32> to vector<8x512xf32>
    %219 = arith.truncf %211 : vector<8x128xf32> to vector<8x128xbf16>
    %cst_56 = arith.constant dense<0.000000e+00> : vector<8x512xf32>
    %220 = tpu.matmul %219, %3, %cst_56 {dimension_numbers = #tpu.dot_dimension_numbers<[1], [0], [0], [1], [0, 0, 1, 1], [], []>} : vector<8x128xbf16>, vector<128x512xbf16>, vector<8x512xf32> -> vector<8x512xf32>
    %221 = arith.addf %218, %220 : vector<8x512xf32>
    %222 = vector.extract_strided_slice %221 {offsets = [0, 0], sizes = [8, 128], strides = [1, 1]} : vector<8x512xf32> to vector<8x128xf32>
    %223 = arith.negf %222 : vector<8x128xf32>
    %224 = math.exp %223 : vector<8x128xf32>
    %cst_57 = arith.constant 1.000000e+00 : f32
    %225 = vector.broadcast %cst_57 : f32 to vector<8x128xf32>
    %226 = arith.addf %225, %224 : vector<8x128xf32>
    %227 = arith.divf %225, %226 : vector<8x128xf32>
    %228 = vector.extract_strided_slice %221 {offsets = [0, 128], sizes = [8, 128], strides = [1, 1]} : vector<8x512xf32> to vector<8x128xf32>
    %229 = arith.negf %228 : vector<8x128xf32>
    %230 = math.exp %229 : vector<8x128xf32>
    %cst_58 = arith.constant 1.000000e+00 : f32
    %231 = vector.broadcast %cst_58 : f32 to vector<8x128xf32>
    %232 = arith.addf %231, %230 : vector<8x128xf32>
    %233 = arith.divf %231, %232 : vector<8x128xf32>
    %234 = vector.extract_strided_slice %221 {offsets = [0, 256], sizes = [8, 128], strides = [1, 1]} : vector<8x512xf32> to vector<8x128xf32>
    %235 = math.tanh %234 : vector<8x128xf32>
    %236 = vector.extract_strided_slice %221 {offsets = [0, 384], sizes = [8, 128], strides = [1, 1]} : vector<8x512xf32> to vector<8x128xf32>
    %237 = arith.negf %236 : vector<8x128xf32>
    %238 = math.exp %237 : vector<8x128xf32>
    %cst_59 = arith.constant 1.000000e+00 : f32
    %239 = vector.broadcast %cst_59 : f32 to vector<8x128xf32>
    %240 = arith.addf %239, %238 : vector<8x128xf32>
    %241 = arith.divf %239, %240 : vector<8x128xf32>
    %242 = arith.mulf %233, %209 : vector<8x128xf32>
    %243 = arith.mulf %227, %235 : vector<8x128xf32>
    %244 = arith.addf %242, %243 : vector<8x128xf32>
    %245 = math.tanh %244 : vector<8x128xf32>
    %246 = arith.mulf %241, %245 : vector<8x128xf32>
    %247 = arith.index_cast %c6_i32 : i32 to index
    %c0_60 = arith.constant 0 : index
    %c0_61 = arith.constant 0 : index
    %248 = vector.load %arg3[%247, %c0_60, %c0_61] : memref<8x8x128xf32, #tpu.memory_space<vmem>>, vector<1x8x128xf32>
    %249 = vector.shape_cast %248 : vector<1x8x128xf32> to vector<8x128xf32>
    %250 = vector.shape_cast %246 : vector<8x128xf32> to vector<1x8x128xf32>
    tpu.vector_store %arg3[%247, %c0_60, %c0_61], %250 {strides = array<i32>} : memref<8x8x128xf32, #tpu.memory_space<vmem>>, vector<1x8x128xf32>,
    %c7_i32 = arith.constant 7 : i32
    %251 = arith.index_cast %c7_i32 : i32 to index
    %c0_62 = arith.constant 0 : index
    %c0_63 = arith.constant 0 : index
    %252 = vector.load %arg1[%251, %c0_62, %c0_63] : memref<8x8x512xf32, #tpu.memory_space<vmem>>, vector<1x8x512xf32>
    %253 = vector.shape_cast %252 : vector<1x8x512xf32> to vector<8x512xf32>
    %254 = arith.truncf %246 : vector<8x128xf32> to vector<8x128xbf16>
    %cst_64 = arith.constant dense<0.000000e+00> : vector<8x512xf32>
    %255 = tpu.matmul %254, %3, %cst_64 {dimension_numbers = #tpu.dot_dimension_numbers<[1], [0], [0], [1], [0, 0, 1, 1], [], []>} : vector<8x128xbf16>, vector<128x512xbf16>, vector<8x512xf32> -> vector<8x512xf32>
    %256 = arith.addf %253, %255 : vector<8x512xf32>
    %257 = vector.extract_strided_slice %256 {offsets = [0, 0], sizes = [8, 128], strides = [1, 1]} : vector<8x512xf32> to vector<8x128xf32>
    %258 = arith.negf %257 : vector<8x128xf32>
    %259 = math.exp %258 : vector<8x128xf32>
    %cst_65 = arith.constant 1.000000e+00 : f32
    %260 = vector.broadcast %cst_65 : f32 to vector<8x128xf32>
    %261 = arith.addf %260, %259 : vector<8x128xf32>
    %262 = arith.divf %260, %261 : vector<8x128xf32>
    %263 = vector.extract_strided_slice %256 {offsets = [0, 128], sizes = [8, 128], strides = [1, 1]} : vector<8x512xf32> to vector<8x128xf32>
    %264 = arith.negf %263 : vector<8x128xf32>
    %265 = math.exp %264 : vector<8x128xf32>
    %cst_66 = arith.constant 1.000000e+00 : f32
    %266 = vector.broadcast %cst_66 : f32 to vector<8x128xf32>
    %267 = arith.addf %266, %265 : vector<8x128xf32>
    %268 = arith.divf %266, %267 : vector<8x128xf32>
    %269 = vector.extract_strided_slice %256 {offsets = [0, 256], sizes = [8, 128], strides = [1, 1]} : vector<8x512xf32> to vector<8x128xf32>
    %270 = math.tanh %269 : vector<8x128xf32>
    %271 = vector.extract_strided_slice %256 {offsets = [0, 384], sizes = [8, 128], strides = [1, 1]} : vector<8x512xf32> to vector<8x128xf32>
    %272 = arith.negf %271 : vector<8x128xf32>
    %273 = math.exp %272 : vector<8x128xf32>
    %cst_67 = arith.constant 1.000000e+00 : f32
    %274 = vector.broadcast %cst_67 : f32 to vector<8x128xf32>
    %275 = arith.addf %274, %273 : vector<8x128xf32>
    %276 = arith.divf %274, %275 : vector<8x128xf32>
    %277 = arith.mulf %268, %244 : vector<8x128xf32>
    %278 = arith.mulf %262, %270 : vector<8x128xf32>
    %279 = arith.addf %277, %278 : vector<8x128xf32>
    %280 = math.tanh %279 : vector<8x128xf32>
    %281 = arith.mulf %276, %280 : vector<8x128xf32>
    %282 = arith.index_cast %c7_i32 : i32 to index
    %c0_68 = arith.constant 0 : index
    %c0_69 = arith.constant 0 : index
    %283 = vector.load %arg3[%282, %c0_68, %c0_69] : memref<8x8x128xf32, #tpu.memory_space<vmem>>, vector<1x8x128xf32>
    %284 = vector.shape_cast %283 : vector<1x8x128xf32> to vector<8x128xf32>
    %285 = vector.shape_cast %281 : vector<8x128xf32> to vector<1x8x128xf32>
    tpu.vector_store %arg3[%282, %c0_68, %c0_69], %285 {strides = array<i32>} : memref<8x8x128xf32, #tpu.memory_space<vmem>>, vector<1x8x128xf32>,
    %c8_i32 = arith.constant 8 : i32
    %c0_70 = arith.constant 0 : index
    %c0_71 = arith.constant 0 : index
    %286 = vector.load %arg4[%c0_70, %c0_71] : memref<8x128xf32, #tpu.memory_space<vmem>>, vector<8x128xf32>
    tpu.vector_store %arg4[%c0_70, %c0_71], %281 {strides = array<i32>} : memref<8x128xf32, #tpu.memory_space<vmem>>, vector<8x128xf32>,
    %c0_72 = arith.constant 0 : index
    %c0_73 = arith.constant 0 : index
    %287 = vector.load %arg5[%c0_72, %c0_73] : memref<8x128xf32, #tpu.memory_space<vmem>>, vector<8x128xf32>
    tpu.vector_store %arg5[%c0_72, %c0_73], %279 {strides = array<i32>} : memref<8x128xf32, #tpu.memory_space<vmem>>, vector<8x128xf32>,
    return
  }
  func.func @transform_0(%arg0: i32) -> (i32, i32, i32) {
    %c0_i32 = arith.constant 0 : i32
    %c0_i32_0 = arith.constant 0 : i32
    %c0_i32_1 = arith.constant 0 : i32
    return %arg0, %c0_i32, %c0_i32_0 : i32, i32, i32
  }
  func.func @transform_1(%arg0: i32) -> (i32, i32) {
    %c0_i32 = arith.constant 0 : i32
    %c0_i32_0 = arith.constant 0 : i32
    %c0_i32_1 = arith.constant 0 : i32
    return %c0_i32, %c0_i32_0 : i32, i32
  }
  func.func @transform_2(%arg0: i32) -> (i32, i32, i32) {
    %c0_i32 = arith.constant 0 : i32
    %c0_i32_0 = arith.constant 0 : i32
    %c0_i32_1 = arith.constant 0 : i32
    return %arg0, %c0_i32, %c0_i32_0 : i32, i32, i32
  }
}

module attributes {stable_mosaic.version = 11 : i64} {
  func.func @_matmul_bias_kernel(%arg0: i32, %arg1: i32, %arg2: i32, %arg3: memref<64x128xbf16, #tpu.memory_space<vmem>>, %arg4: memref<128x256xbf16, #tpu.memory_space<vmem>>, %arg5: memref<1x256xf32, #tpu.memory_space<vmem>>, %arg6: memref<64x256xf32, #tpu.memory_space<vmem>>, %arg7: memref<64x256xf32, #tpu.memory_space<vmem>>) attributes {dimension_semantics = [#tpu.dimension_semantics<parallel>, #tpu.dimension_semantics<parallel>, #tpu.dimension_semantics<arbitrary>], iteration_bounds = array<i64: 1, 1, 1>, scalar_prefetch = 0 : i64, scratch_operands = 1 : i64, tpu.core_type = #tpu.core_type<tc>, window_params = [{transform_indices = @transform_0, window_bounds = array<i64: 64, 128>}, {transform_indices = @transform_1, window_bounds = array<i64: 128, 256>}, {transform_indices = @transform_2, window_bounds = array<i64: 1, 256>}, {transform_indices = @transform_3, window_bounds = array<i64: 64, 256>}]} {
    %c0_i32 = arith.constant 0 : i32
    %0 = arith.cmpi eq, %arg2, %c0_i32 : i32
    %1 = arith.extui %0 : i1 to i32
    %c0_i32_0 = arith.constant 0 : i32
    %2 = arith.cmpi ne, %1, %c0_i32_0 : i32
    scf.if %2 {
      %cst_10 = arith.constant 0.000000e+00 : f32
      %12 = vector.broadcast %cst_10 : f32 to vector<64x256xf32>
      %c0_11 = arith.constant 0 : index
      %c0_12 = arith.constant 0 : index
      %13 = vector.load %arg7[%c0_11, %c0_12] : memref<64x256xf32, #tpu.memory_space<vmem>>, vector<64x256xf32>
      tpu.vector_store %arg7[%c0_11, %c0_12], %12 {strides = array<i32>} : memref<64x256xf32, #tpu.memory_space<vmem>>, vector<64x256xf32>,
    } else {
    }
    %c0 = arith.constant 0 : index
    %c0_1 = arith.constant 0 : index
    %3 = vector.load %arg7[%c0, %c0_1] : memref<64x256xf32, #tpu.memory_space<vmem>>, vector<64x256xf32>
    %c0_2 = arith.constant 0 : index
    %c0_3 = arith.constant 0 : index
    %4 = vector.load %arg3[%c0_2, %c0_3] : memref<64x128xbf16, #tpu.memory_space<vmem>>, vector<64x128xbf16>
    %c0_4 = arith.constant 0 : index
    %c0_5 = arith.constant 0 : index
    %5 = vector.load %arg4[%c0_4, %c0_5] : memref<128x256xbf16, #tpu.memory_space<vmem>>, vector<128x256xbf16>
    %cst = arith.constant dense<0.000000e+00> : vector<64x256xf32>
    %6 = tpu.matmul %4, %5, %cst {dimension_numbers = #tpu.dot_dimension_numbers<[1], [0], [0], [1], [0, 0, 1, 1], [], []>} : vector<64x128xbf16>, vector<128x256xbf16>, vector<64x256xf32> -> vector<64x256xf32>
    %7 = arith.addf %3, %6 : vector<64x256xf32>
    %c0_6 = arith.constant 0 : index
    %c0_7 = arith.constant 0 : index
    %8 = vector.load %arg7[%c0_6, %c0_7] : memref<64x256xf32, #tpu.memory_space<vmem>>, vector<64x256xf32>
    tpu.vector_store %arg7[%c0_6, %c0_7], %7 {strides = array<i32>} : memref<64x256xf32, #tpu.memory_space<vmem>>, vector<64x256xf32>,
    %c0_i32_8 = arith.constant 0 : i32
    %9 = arith.cmpi eq, %arg2, %c0_i32_8 : i32
    %10 = arith.extui %9 : i1 to i32
    %c0_i32_9 = arith.constant 0 : i32
    %11 = arith.cmpi ne, %10, %c0_i32_9 : i32
    scf.if %11 {
      %c0_10 = arith.constant 0 : index
      %c0_11 = arith.constant 0 : index
      %12 = vector.load %arg7[%c0_10, %c0_11] : memref<64x256xf32, #tpu.memory_space<vmem>>, vector<64x256xf32>
      %c0_12 = arith.constant 0 : index
      %c0_13 = arith.constant 0 : index
      %13 = vector.load %arg5[%c0_12, %c0_13] : memref<1x256xf32, #tpu.memory_space<vmem>>, vector<1x256xf32>
      %14 = vector.broadcast %13 : vector<1x256xf32> to vector<64x256xf32>
      %15 = arith.addf %12, %14 : vector<64x256xf32>
      %c0_14 = arith.constant 0 : index
      %c0_15 = arith.constant 0 : index
      %16 = vector.load %arg6[%c0_14, %c0_15] : memref<64x256xf32, #tpu.memory_space<vmem>>, vector<64x256xf32>
      tpu.vector_store %arg6[%c0_14, %c0_15], %15 {strides = array<i32>} : memref<64x256xf32, #tpu.memory_space<vmem>>, vector<64x256xf32>,
    } else {
    }
    return
  }
  func.func @transform_0(%arg0: i32, %arg1: i32, %arg2: i32) -> (i32, i32) {
    %c0_i32 = arith.constant 0 : i32
    return %arg0, %arg2 : i32, i32
  }
  func.func @transform_1(%arg0: i32, %arg1: i32, %arg2: i32) -> (i32, i32) {
    %c0_i32 = arith.constant 0 : i32
    return %arg2, %arg1 : i32, i32
  }
  func.func @transform_2(%arg0: i32, %arg1: i32, %arg2: i32) -> (i32, i32) {
    %c0_i32 = arith.constant 0 : i32
    %c0_i32_0 = arith.constant 0 : i32
    return %c0_i32, %arg1 : i32, i32
  }
  func.func @transform_3(%arg0: i32, %arg1: i32, %arg2: i32) -> (i32, i32) {
    %c0_i32 = arith.constant 0 : i32
    return %arg0, %arg1 : i32, i32
  }
}

</mosaic_0001>

<llo_original>
// kernel: _lambda_.5
$region0: #{_lambda_.5}
  #allocation0 [shape = 'u32[]', space=smem, size = 0x4, offset = 0x4, fixed_abs, tag = 'smem constant byte address 0x4 - core index']
  #allocation1 [shape = 'u32[144,128]{1,0:T(1,128)}', space=vmem, size = 0x12000, scoped, tag = 'internal scratch']
  #allocation2 [shape = 'f32[64,256]{1,0:T(8,128)}', space=vmem, size = 0x10000, scoped, tag = 'scratch operand']
  %s0 = inlined_call_operand.vmem [shape: bf16[64,128], index: 0, kind: input, shape index: {}]
  %s1 = inlined_call_operand.vmem [shape: bf16[128,256], index: 1, kind: input, shape index: {}]
  %s2 = inlined_call_operand.vmem [shape: f32[1,256], index: 2, kind: input, shape index: {}]
  %s3 = inlined_call_operand.vmem [shape: f32[64,256], index: 3, kind: output, shape index: {}]
  %s4 = sld [smem:[#allocation0]]
  $region30: #{_lambda_.5} parent=0
    _
  %s6 = ssub.s32 1, %s4
  %s7 = scalar_select 0, %s6, %s4
  // Predicated region
  $region2: #{_lambda_.5} parent=0 // pred_check
    _
  $region3: #{_lambda_.5} parent=0 // pred_check_branch
    %9 = sbr.rel (0) target = $region5
  $region4: #{_lambda_.5} parent=0 // pred_region
    _
  $region5: #{_lambda_.5} parent=0 // pred_fallthru
    _
  // Predicated region
  $region6: #{_lambda_.5} parent=0 // pred_check
    _
  $region7: #{_lambda_.5} parent=0 // pred_check_branch
    %11 = sbr.rel (0) target = $region9
  $region8: #{_lambda_.5} parent=0 // pred_region
    _
  $region9: #{_lambda_.5} parent=0 // pred_fallthru
    _
  // Predicated region
  $region10: #{_lambda_.5} parent=0 // pred_check
    _
  $region11: #{_lambda_.5} parent=0 // pred_check_branch
    %13 = sbr.rel (0) target = $region13
  $region12: #{_lambda_.5} parent=0 // pred_region
    _
  $region13: #{_lambda_.5} parent=0 // pred_fallthru
    _
  %p15 = scmp.eq.s32.totalorder 0, 0
  // Predicated region
  $region14: #{_lambda_.5} parent=0 // pred_check
    %p16 = pneg %p15
  $region15: #{_lambda_.5} parent=0 // pred_check_branch
    %18 = sbr.rel (%p16) target = $region17
  $region16: #{_lambda_.5} parent=0 // pred_region
    %19 = vst [vmem:[#allocation2] sm:$0xff] 0.0
    %20 = vst [vmem:[#allocation2 + $0x8] sm:$0xff] 0.0
    %21 = vst [vmem:[#allocation2 + $0x10] sm:$0xff] 0.0
    %22 = vst [vmem:[#allocation2 + $0x18] sm:$0xff] 0.0
    %23 = vst [vmem:[#allocation2 + $0x20] sm:$0xff] 0.0
    %24 = vst [vmem:[#allocation2 + $0x28] sm:$0xff] 0.0
    %25 = vst [vmem:[#allocation2 + $0x30] sm:$0xff] 0.0
    %26 = vst [vmem:[#allocation2 + $0x38] sm:$0xff] 0.0
    %27 = vst [vmem:[#allocation2 + $0x40] sm:$0xff] 0.0
    %28 = vst [vmem:[#allocation2 + $0x48] sm:$0xff] 0.0
    %29 = vst [vmem:[#allocation2 + $0x50] sm:$0xff] 0.0
    %30 = vst [vmem:[#allocation2 + $0x58] sm:$0xff] 0.0
    %31 = vst [vmem:[#allocation2 + $0x60] sm:$0xff] 0.0
    %32 = vst [vmem:[#allocation2 + $0x68] sm:$0xff] 0.0
    %33 = vst [vmem:[#allocation2 + $0x70] sm:$0xff] 0.0
    %34 = vst [vmem:[#allocation2 + $0x78] sm:$0xff] 0.0
  $region17: #{_lambda_.5} parent=0 // pred_fallthru
    _
  %v35 = vld [vmem:[#allocation2] sm:$0xff]
  %v36 = vld [vmem:[#allocation2 + $0x8] sm:$0xff]
  %v37 = vld [vmem:[#allocation2 + $0x10] sm:$0xff]
  %v38 = vld [vmem:[#allocation2 + $0x18] sm:$0xff]
  %v39 = vld [vmem:[#allocation2 + $0x20] sm:$0xff]
  %v40 = vld [vmem:[#allocation2 + $0x28] sm:$0xff]
  %v41 = vld [vmem:[#allocation2 + $0x30] sm:$0xff]
  %v42 = vld [vmem:[#allocation2 + $0x38] sm:$0xff]
  %v43 = vld [vmem:[#allocation2 + $0x40] sm:$0xff]
  %v44 = vld [vmem:[#allocation2 + $0x48] sm:$0xff]
  %v45 = vld [vmem:[#allocation2 + $0x50] sm:$0xff]
  %v46 = vld [vmem:[#allocation2 + $0x58] sm:$0xff]
  %v47 = vld [vmem:[#allocation2 + $0x60] sm:$0xff]
  %v48 = vld [vmem:[#allocation2 + $0x68] sm:$0xff]
  %v49 = vld [vmem:[#allocation2 + $0x70] sm:$0xff]
  %v50 = vld [vmem:[#allocation2 + $0x78] sm:$0xff]
  %v51 = vld [vmem:[%s0] sm:$0xf]
  %v52 = vld [vmem:[%s0 + $0x4] sm:$0xf]
  %v53 = vld [vmem:[%s0 + $0x8] sm:$0xf]
  %v54 = vld [vmem:[%s0 + $0xc] sm:$0xf]
  %v55 = vld [vmem:[%s0 + $0x10] sm:$0xf]
  %v56 = vld [vmem:[%s0 + $0x14] sm:$0xf]
  %v57 = vld [vmem:[%s0 + $0x18] sm:$0xf]
  %v58 = vld [vmem:[%s0 + $0x1c] sm:$0xf]
  %v59 = vld [vmem:[%s1] sm:$0xff]
  %v60 = vld [vmem:[%s1 + $0x8] sm:$0xff]
  %v61 = vld [vmem:[%s1 + $0x10] sm:$0xff]
  %v62 = vld [vmem:[%s1 + $0x18] sm:$0xff]
  %v63 = vld [vmem:[%s1 + $0x20] sm:$0xff]
  %v64 = vld [vmem:[%s1 + $0x28] sm:$0xff]
  %v65 = vld [vmem:[%s1 + $0x30] sm:$0xff]
  %v66 = vld [vmem:[%s1 + $0x38] sm:$0xff]
  %v67 = vld [vmem:[%s1 + $0x40] sm:$0xff]
  %v68 = vld [vmem:[%s1 + $0x48] sm:$0xff]
  %v69 = vld [vmem:[%s1 + $0x50] sm:$0xff]
  %v70 = vld [vmem:[%s1 + $0x58] sm:$0xff]
  %v71 = vld [vmem:[%s1 + $0x60] sm:$0xff]
  %v72 = vld [vmem:[%s1 + $0x68] sm:$0xff]
  %v73 = vld [vmem:[%s1 + $0x70] sm:$0xff]
  %v74 = vld [vmem:[%s1 + $0x78] sm:$0xff]
  %v83 = vunpack.c.l.b16 %v51
  %v84 = vunpack.c.l.b16 %v52
  %v85 = vunpack.c.l.b16 %v53
  %v86 = vunpack.c.l.b16 %v54
  %v87 = vunpack.c.l.b16 %v55
  %v88 = vunpack.c.l.b16 %v56
  %v89 = vunpack.c.l.b16 %v57
  %v90 = vunpack.c.l.b16 %v58
  %v91 = vpack.c.b16 %v84, %v83
  %v92 = vpack.c.b16 %v86, %v85
  %v93 = vpack.c.b16 %v88, %v87
  %v94 = vpack.c.b16 %v90, %v89
  %v115 = vunpack.c.l.b16 %v59
  %v116 = vunpack.c.h.b16 %v59
  %v117 = vunpack.c.l.b16 %v60
  %v118 = vunpack.c.h.b16 %v60
  %v119 = vunpack.c.l.b16 %v61
  %v120 = vunpack.c.h.b16 %v61
  %v121 = vunpack.c.l.b16 %v62
  %v122 = vunpack.c.h.b16 %v62
  %v123 = vunpack.c.l.b16 %v63
  %v124 = vunpack.c.h.b16 %v63
  %v125 = vunpack.c.l.b16 %v64
  %v126 = vunpack.c.h.b16 %v64
  %v127 = vunpack.c.l.b16 %v65
  %v128 = vunpack.c.h.b16 %v65
  %v129 = vunpack.c.l.b16 %v66
  %v130 = vunpack.c.h.b16 %v66
  %v131 = vunpack.c.l.b16 %v67
  %v132 = vunpack.c.h.b16 %v67
  %v133 = vunpack.c.l.b16 %v68
  %v134 = vunpack.c.h.b16 %v68
  %v135 = vunpack.c.l.b16 %v69
  %v136 = vunpack.c.h.b16 %v69
  %v137 = vunpack.c.l.b16 %v70
  %v138 = vunpack.c.h.b16 %v70
  %v139 = vunpack.c.l.b16 %v71
  %v140 = vunpack.c.h.b16 %v71
  %v141 = vunpack.c.l.b16 %v72
  %v142 = vunpack.c.h.b16 %v72
  %v143 = vunpack.c.l.b16 %v73
  %v144 = vunpack.c.h.b16 %v73
  %v145 = vunpack.c.l.b16 %v74
  %v146 = vunpack.c.h.b16 %v74
  %v147 = vpack.c.b16 %v117, %v115
  %v148 = vpack.c.b16 %v118, %v116
  %v149 = vpack.c.b16 %v121, %v119
  %v150 = vpack.c.b16 %v122, %v120
  %v151 = vpack.c.b16 %v125, %v123
  %v152 = vpack.c.b16 %v126, %v124
  %v153 = vpack.c.b16 %v129, %v127
  %v154 = vpack.c.b16 %v130, %v128
  %v155 = vpack.c.b16 %v133, %v131
  %v156 = vpack.c.b16 %v134, %v132
  %v157 = vpack.c.b16 %v137, %v135
  %v158 = vpack.c.b16 %v138, %v136
  %v159 = vpack.c.b16 %v141, %v139
  %v160 = vpack.c.b16 %v142, %v140
  %v161 = vpack.c.b16 %v145, %v143
  %v162 = vpack.c.b16 %v146, %v144
  %179 = vmatprep.subr.bf16.mxu0 %v148
  %180 = vmatpush1.bf16.msra.mxu0 %v147
  %181 = vmatprep.subr.bf16.mxu0 %v150
  %182 = vmatpush1.bf16.msra.mxu0 %v149
  %183 = vmatprep.subr.bf16.mxu0 %v152
  %184 = vmatpush1.bf16.msra.mxu0 %v151
  %185 = vmatprep.subr.bf16.mxu0 %v154
  %186 = vmatpush1.bf16.msra.mxu0 %v153
  %187 = vmatprep.subr.bf16.mxu0 %v156
  %188 = vmatpush1.bf16.msra.mxu0 %v155
  %189 = vmatprep.subr.bf16.mxu0 %v158
  %190 = vmatpush1.bf16.msra.mxu0 %v157
  %191 = vmatprep.subr.bf16.mxu0 %v160
  %192 = vmatpush1.bf16.msra.mxu0 %v159
  %193 = vmatprep.subr.bf16.mxu0 %v162
  %194 = vmatpush1.bf16.msra.mxu0 %v161
  %195 = vmatprep.subr.bf16.mxu0 0
  %196 = vmatpush1.bf16.msra.mxu0 0
  %197 = vmatprep.subr.bf16.mxu0 0
  %198 = vmatpush1.bf16.msra.mxu0 0
  %199 = vmatprep.subr.bf16.mxu0 0
  %200 = vmatpush1.bf16.msra.mxu0 0
  %201 = vmatprep.subr.bf16.mxu0 0
  %202 = vmatpush1.bf16.msra.mxu0 0
  %203 = vmatprep.subr.bf16.mxu0 0
  %204 = vmatpush1.bf16.msra.mxu0 0
  %205 = vmatprep.subr.bf16.mxu0 0
  %206 = vmatpush1.bf16.msra.mxu0 0
  %207 = vmatprep.subr.bf16.mxu0 0
  %208 = vmatpush1.bf16.msra.mxu0 0
  %209 = vmatprep.subr.bf16.mxu0 0
  %210 = vmatpush1.bf16.msra.mxu0 0
  %211 = vmatprep.mubr.bf16.mxu0 0
  %212 = vmatmul.mubr.bf16.gmra.mrb[0].mxu0 %v91
  %v213 = vpop.f32.mrb[0].mxu0
  %v214 = vadd.f32 0.0, %v213
  %v215 = vpop.f32.mrb[0].mxu0
  %v216 = vadd.f32 0.0, %v215
  %v217 = vpop.f32.mrb[0].mxu0
  %v218 = vadd.f32 0.0, %v217
  %v219 = vpop.f32.mrb[0].mxu0
  %v220 = vadd.f32 0.0, %v219
  %221 = vmatprep.mubr.bf16.mxu0 0
  %222 = vmatmul.mubr.bf16.gmra.mrb[0].mxu0 %v92
  %v223 = vpop.f32.mrb[0].mxu0
  %v224 = vadd.f32 0.0, %v223
  %v225 = vpop.f32.mrb[0].mxu0
  %v226 = vadd.f32 0.0, %v225
  %v227 = vpop.f32.mrb[0].mxu0
  %v228 = vadd.f32 0.0, %v227
  %v229 = vpop.f32.mrb[0].mxu0
  %v230 = vadd.f32 0.0, %v229
  %231 = vmatprep.mubr.bf16.mxu0 0
  %232 = vmatmul.mubr.bf16.gmra.mrb[0].mxu0 %v93
  %v233 = vpop.f32.mrb[0].mxu0
  %v234 = vadd.f32 0.0, %v233
  %v235 = vpop.f32.mrb[0].mxu0
  %v236 = vadd.f32 0.0, %v235
  %v237 = vpop.f32.mrb[0].mxu0
  %v238 = vadd.f32 0.0, %v237
  %v239 = vpop.f32.mrb[0].mxu0
  %v240 = vadd.f32 0.0, %v239
  %241 = vmatprep.mubr.bf16.mxu0 0
  %242 = vmatmul.mubr.bf16.gmra.mrb[0].mxu0 %v94
  %v243 = vpop.f32.mrb[0].mxu0
  %v244 = vadd.f32 0.0, %v243
  %v245 = vpop.f32.mrb[0].mxu0
  %v246 = vadd.f32 0.0, %v245
  %v247 = vpop.f32.mrb[0].mxu0
  %v248 = vadd.f32 0.0, %v247
  %v249 = vpop.f32.mrb[0].mxu0
  %v250 = vadd.f32 0.0, %v249
  %251 = vdwg.mxu0
  %v252 = vadd.f32 %v35, %v214
  %v253 = vadd.f32 %v36, %v216
  %v254 = vadd.f32 %v37, %v218
  %v255 = vadd.f32 %v38, %v220
  %v256 = vadd.f32 %v39, %v224
  %v257 = vadd.f32 %v40, %v226
  %v258 = vadd.f32 %v41, %v228
  %v259 = vadd.f32 %v42, %v230
  %v260 = vadd.f32 %v43, %v234
  %v261 = vadd.f32 %v44, %v236
  %v262 = vadd.f32 %v45, %v238
  %v263 = vadd.f32 %v46, %v240
  %v264 = vadd.f32 %v47, %v244
  %v265 = vadd.f32 %v48, %v246
  %v266 = vadd.f32 %v49, %v248
  %v267 = vadd.f32 %v50, %v250
  %268 = vst [vmem:[#allocation2] sm:$0xff] %v252
  %269 = vst [vmem:[#allocation2 + $0x8] sm:$0xff] %v253
  %270 = vst [vmem:[#allocation2 + $0x10] sm:$0xff] %v254
  %271 = vst [vmem:[#allocation2 + $0x18] sm:$0xff] %v255
  %272 = vst [vmem:[#allocation2 + $0x20] sm:$0xff] %v256
  %273 = vst [vmem:[#allocation2 + $0x28] sm:$0xff] %v257
  %274 = vst [vmem:[#allocation2 + $0x30] sm:$0xff] %v258
  %275 = vst [vmem:[#allocation2 + $0x38] sm:$0xff] %v259
  %276 = vst [vmem:[#allocation2 + $0x40] sm:$0xff] %v260
  %277 = vst [vmem:[#allocation2 + $0x48] sm:$0xff] %v261
  %278 = vst [vmem:[#allocation2 + $0x50] sm:$0xff] %v262
  %279 = vst [vmem:[#allocation2 + $0x58] sm:$0xff] %v263
  %280 = vst [vmem:[#allocation2 + $0x60] sm:$0xff] %v264
  %281 = vst [vmem:[#allocation2 + $0x68] sm:$0xff] %v265
  %282 = vst [vmem:[#allocation2 + $0x70] sm:$0xff] %v266
  %283 = vst [vmem:[#allocation2 + $0x78] sm:$0xff] %v267
  // Predicated region
  $region18: #{_lambda_.5} parent=0 // pred_check
    %p284 = pneg %p15
  $region19: #{_lambda_.5} parent=0 // pred_check_branch
    %286 = sbr.rel (%p284) target = $region21
  $region20: #{_lambda_.5} parent=0 // pred_region
    %v287 = vld [vmem:[#allocation2] sm:$0xff]
    %v288 = vld [vmem:[#allocation2 + $0x8] sm:$0xff]
    %v289 = vld [vmem:[#allocation2 + $0x10] sm:$0xff]
    %v290 = vld [vmem:[#allocation2 + $0x18] sm:$0xff]
    %v291 = vld [vmem:[#allocation2 + $0x20] sm:$0xff]
    %v292 = vld [vmem:[#allocation2 + $0x28] sm:$0xff]
    %v293 = vld [vmem:[#allocation2 + $0x30] sm:$0xff]
    %v294 = vld [vmem:[#allocation2 + $0x38] sm:$0xff]
    %v295 = vld [vmem:[#allocation2 + $0x40] sm:$0xff]
    %v296 = vld [vmem:[#allocation2 + $0x48] sm:$0xff]
    %v297 = vld [vmem:[#allocation2 + $0x50] sm:$0xff]
    %v298 = vld [vmem:[#allocation2 + $0x58] sm:$0xff]
    %v299 = vld [vmem:[#allocation2 + $0x60] sm:$0xff]
    %v300 = vld [vmem:[#allocation2 + $0x68] sm:$0xff]
    %v301 = vld [vmem:[#allocation2 + $0x70] sm:$0xff]
    %v302 = vld [vmem:[#allocation2 + $0x78] sm:$0xff]
    %v303 = vld [vmem:[%s2] sm:$0x3]
    %v305 = vlaneseq
    %v306 = vshrl.u32 %v305, 7
    %v307 = vsub.s32 0, %v306
    %v308 = vrot.slane %v303, %v307
    %v309 = vlaneseq
    %v310 = vshrl.u32 %v309, 7
    %v311 = vsub.s32 1, %v310
    %v312 = vrot.slane %v303, %v311
    %v315 = vadd.f32 %v287, %v308
    %v316 = vadd.f32 %v288, %v312
    %v317 = vadd.f32 %v289, %v308
    %v318 = vadd.f32 %v290, %v312
    %v319 = vadd.f32 %v291, %v308
    %v320 = vadd.f32 %v292, %v312
    %v321 = vadd.f32 %v293, %v308
    %v322 = vadd.f32 %v294, %v312
    %v323 = vadd.f32 %v295, %v308
    %v324 = vadd.f32 %v296, %v312
    %v325 = vadd.f32 %v297, %v308
    %v326 = vadd.f32 %v298, %v312
    %v327 = vadd.f32 %v299, %v308
    %v328 = vadd.f32 %v300, %v312
    %v329 = vadd.f32 %v301, %v308
    %v330 = vadd.f32 %v302, %v312
    %331 = vst [vmem:[%s3] sm:$0xff] %v315
    %332 = vst [vmem:[%s3 + $0x8] sm:$0xff] %v316
    %333 = vst [vmem:[%s3 + $0x10] sm:$0xff] %v317
    %334 = vst [vmem:[%s3 + $0x18] sm:$0xff] %v318
    %335 = vst [vmem:[%s3 + $0x20] sm:$0xff] %v319
    %336 = vst [vmem:[%s3 + $0x28] sm:$0xff] %v320
    %337 = vst [vmem:[%s3 + $0x30] sm:$0xff] %v321
    %338 = vst [vmem:[%s3 + $0x38] sm:$0xff] %v322
    %339 = vst [vmem:[%s3 + $0x40] sm:$0xff] %v323
    %340 = vst [vmem:[%s3 + $0x48] sm:$0xff] %v324
    %341 = vst [vmem:[%s3 + $0x50] sm:$0xff] %v325
    %342 = vst [vmem:[%s3 + $0x58] sm:$0xff] %v326
    %343 = vst [vmem:[%s3 + $0x60] sm:$0xff] %v327
    %344 = vst [vmem:[%s3 + $0x68] sm:$0xff] %v328
    %345 = vst [vmem:[%s3 + $0x70] sm:$0xff] %v329
    %346 = vst [vmem:[%s3 + $0x78] sm:$0xff] %v330
  $region21: #{_lambda_.5} parent=0 // pred_fallthru
    _
  // Predicated region
  $region22: #{_lambda_.5} parent=0 // pred_check
    _
  $region23: #{_lambda_.5} parent=0 // pred_check_branch
    %348 = sbr.rel (0) target = $region25
  $region24: #{_lambda_.5} parent=0 // pred_region
    _
  $region25: #{_lambda_.5} parent=0 // pred_fallthru
    _
  // Predicated region
  $region26: #{_lambda_.5} parent=0 // pred_check
    _
  $region27: #{_lambda_.5} parent=0 // pred_check_branch
    %350 = sbr.rel (0) target = $region29
  $region28: #{_lambda_.5} parent=0 // pred_region
    _
  $region29: #{_lambda_.5} parent=0 // pred_fallthru
    _

// kernel: _lambda_.3
$region0: #{_lambda_.3}
  #allocation0 [shape = 'u32[]', space=smem, size = 0x4, offset = 0x4, fixed_abs, tag = 'smem constant byte address 0x4 - core index']
  #allocation1 [shape = 'u32[144,128]{1,0:T(1,128)}', space=vmem, size = 0x12000, scoped, tag = 'internal scratch']
  #allocation2 [shape = 'f32[64,256]{1,0:T(8,128)}', space=vmem, size = 0x10000, scoped, tag = 'scratch operand']
  %s0 = inlined_call_operand.vmem [shape: bf16[64,128], index: 0, kind: input, shape index: {}]
  %s1 = inlined_call_operand.vmem [shape: bf16[128,512], index: 1, kind: input, shape index: {}]
  %s2 = inlined_call_operand.vmem [shape: f32[1,512], index: 2, kind: input, shape index: {}]
  %s3 = inlined_call_operand.vmem [shape: f32[64,512], index: 3, kind: output, shape index: {}]
  %s4 = sld [smem:[#allocation0]]
  $region110: #{_lambda_.3} parent=0
    _
  %s6 = ssub.s32 1, %s4
  %s7 = scalar_select 0, %s6, %s4
  $region1: #{_lambda_.3} parent=0
    #allocation3 [shape = 'u8[131072]{0}', space=vmem, size = 0x20000, scoped, tag = 'input window, operand 1']
    #allocation4 [shape = 'u8[131072]{0}', space=vmem, size = 0x20000, scoped, tag = 'output window, operand 0']
    loop: start=0, step=1, limit=4
    $region2: #{_lambda_.3} parent=1 // loop_pre_header
      _
    $region3: #{_lambda_.3} parent=1 // loop_header
      %s9 = sphi 0, %s13
      %p10 = scmp.ge.s32.totalorder %s9, 4
      %s16 = sphi 0, %s35
      %s17 = sphi 0, %s31
      %s18 = sphi 0, %s27
      %s19 = sphi 0, %s16
      %s20 = sphi 0, %s17
      %s21 = sphi 0, %s18
      %s22 = sphi 0, %s19
      %s23 = sphi 0, %s20
      %s24 = sphi 0, %s21
      %s40 = sphi 0, %s42
      %s43 = sphi 0, %s40
      %s44 = sphi 0, %s43
      %s60 = sphi 0, %s44
      %s68 = sphi 0, %s70
      %s71 = sphi 0, %s68
      %s72 = sphi 0, %s71
      %s88 = sphi 0, %s72
      %s94 = sphi 0, %s96
      %s97 = sphi 0, %s94
      %s98 = sphi 0, %s97
      %s114 = sphi 0, %s98
      %s122 = sphi 0, %s124
      %s125 = sphi 0, %s122
      %s126 = sphi 0, %s125
      %s142 = sphi 0, %s126
    $region4: #{_lambda_.3} parent=1 // loop_header_branch
      %12 = sbr.rel (%p10) target = $region8
    $region5: #{_lambda_.3} parent=1 // loop_body
      %s14 = ssub.s32 %s9, 1
      %s15 = ssub.s32 %s9, 2
      %s25 = sadd.s32 1, %s18
      %p26 = scmp.ge.s32.totalorder %s25, 1
      %s27 = scalar_select %p26, 0, %s25
      %s28 = sadd.s32 1, %s17
      %s29 = scalar_select %p26, %s28, %s17
      %p30 = scmp.ge.s32.totalorder %s29, 2
      %s31 = scalar_select %p30, 0, %s29
      %s32 = sadd.s32 1, %s16
      %s33 = scalar_select %p30, %s32, %s16
      %p34 = scmp.ge.s32.totalorder %s33, 1
      %s35 = scalar_select %p34, 0, %s33
      %s36 = ssub.s32 %s16, %s35
      %s37 = ssub.s32 %s18, %s27
      %s38 = sor.u32 %s36, %s37
      %p39 = scmp.eq.s32.totalorder %s38, 0
      %s41 = sadd.s32 %s40, 1
      %s42 = scalar_select %p39, %s40, %s41
      %p45 = pneg %p39
      %p46 = scmp.eq.s32.totalorder %s9, 1
      %p47 = por %p45, %p46
      %p48 = scmp.ne.s32.totalorder %s40, %s43
      %p49 = scmp.eq.s32.totalorder %s9, 0
      %p50 = por %p48, %p49
      %p51 = scmp.ne.s32.totalorder %s40, %s43
      %p52 = scmp.eq.s32.totalorder %s14, 1
      %p53 = por %p51, %p52
      %p54 = scmp.ne.s32.totalorder %s43, %s44
      %p55 = scmp.eq.s32.totalorder %s14, 0
      %p56 = por %p54, %p55
      %p57 = scmp.ne.s32.totalorder %s43, %s44
      %p58 = scmp.eq.s32.totalorder %s15, 1
      %p59 = por %p57, %p58
      %p61 = scmp.ne.s32.totalorder %s44, %s60
      %p62 = scmp.eq.s32.totalorder %s15, 0
      %p63 = por %p61, %p62
      %s64 = ssub.s32 %s18, %s27
      %s65 = ssub.s32 %s17, %s31
      %s66 = sor.u32 %s64, %s65
      %p67 = scmp.eq.s32.totalorder %s66, 0
      %s69 = sadd.s32 %s68, 1
      %s70 = scalar_select %p67, %s68, %s69
      %p73 = pneg %p67
      %p74 = scmp.eq.s32.totalorder %s9, 1
      %p75 = por %p73, %p74
      %p76 = scmp.ne.s32.totalorder %s68, %s71
      %p77 = scmp.eq.s32.totalorder %s9, 0
      %p78 = por %p76, %p77
      %p79 = scmp.ne.s32.totalorder %s68, %s71
      %p80 = scmp.eq.s32.totalorder %s14, 1
      %p81 = por %p79, %p80
      %p82 = scmp.ne.s32.totalorder %s71, %s72
      %p83 = scmp.eq.s32.totalorder %s14, 0
      %p84 = por %p82, %p83
      %p85 = scmp.ne.s32.totalorder %s71, %s72
      %p86 = scmp.eq.s32.totalorder %s15, 1
      %p87 = por %p85, %p86
      %p89 = scmp.ne.s32.totalorder %s72, %s88
      %p90 = scmp.eq.s32.totalorder %s15, 0
      %p91 = por %p89, %p90
      %s92 = ssub.s32 %s17, %s31
      %p93 = scmp.eq.s32.totalorder %s92, 0
      %s95 = sadd.s32 %s94, 1
      %s96 = scalar_select %p93, %s94, %s95
      %p99 = pneg %p93
      %p100 = scmp.eq.s32.totalorder %s9, 1
      %p101 = por %p99, %p100
      %p102 = scmp.ne.s32.totalorder %s94, %s97
      %p103 = scmp.eq.s32.totalorder %s9, 0
      %p104 = por %p102, %p103
      %p105 = scmp.ne.s32.totalorder %s94, %s97
      %p106 = scmp.eq.s32.totalorder %s14, 1
      %p107 = por %p105, %p106
      %p108 = scmp.ne.s32.totalorder %s97, %s98
      %p109 = scmp.eq.s32.totalorder %s14, 0
      %p110 = por %p108, %p109
      %p111 = scmp.ne.s32.totalorder %s97, %s98
      %p112 = scmp.eq.s32.totalorder %s15, 1
      %p113 = por %p111, %p112
      %p115 = scmp.ne.s32.totalorder %s98, %s114
      %p116 = scmp.eq.s32.totalorder %s15, 0
      %p117 = por %p115, %p116
      %s118 = ssub.s32 %s16, %s35
      %s119 = ssub.s32 %s17, %s31
      %s120 = sor.u32 %s118, %s119
      %p121 = scmp.eq.s32.totalorder %s120, 0
      %s123 = sadd.s32 %s122, 1
      %s124 = scalar_select %p121, %s122, %s123
      %p127 = pneg %p121
      %p128 = scmp.eq.s32.totalorder %s9, 1
      %p129 = por %p127, %p128
      %p130 = scmp.ne.s32.totalorder %s122, %s125
      %p131 = scmp.eq.s32.totalorder %s9, 0
      %p132 = por %p130, %p131
      %p133 = scmp.ne.s32.totalorder %s122, %s125
      %p134 = scmp.eq.s32.totalorder %s14, 1
      %p135 = por %p133, %p134
      %p136 = scmp.ne.s32.totalorder %s125, %s126
      %p137 = scmp.eq.s32.totalorder %s14, 0
      %p138 = por %p136, %p137
      %p139 = scmp.ne.s32.totalorder %s125, %s126
      %p140 = scmp.eq.s32.totalorder %s15, 1
      %p141 = por %p139, %p140
      %p143 = scmp.ne.s32.totalorder %s126, %s142
      %p144 = scmp.eq.s32.totalorder %s15, 0
      %p145 = por %p143, %p144
      %p146 = scmp.le.s32.totalorder 1, %s9
      %p147 = scmp.lt.s32.totalorder %s9, 3
      %p148 = pnand %p146, %p147
      %p149 = pneg %p148
      // Predicated region
      $region9: #{_lambda_.3} parent=5 // pred_check
        _
      $region10: #{_lambda_.3} parent=5 // pred_check_branch
        %151 = sbr.rel (%p148) target = $region12
      $region11: #{_lambda_.3} parent=5 // pred_region
        %s152 = ssub.s32 %s9, 1
        // Predicated region
        $region13: #{_lambda_.3} parent=11 // pred_check
          %p153 = pneg %p56
        $region14: #{_lambda_.3} parent=11 // pred_check_branch
          %155 = sbr.rel (%p153) target = $region16
        $region15: #{_lambda_.3} parent=11 // pred_region
          %s156 = smul.u32 8, %s19
          %p157 = scmp.lt.s32.totalorder %s156, 7
          %s158 = scalar_select %p157, %s156, 7
          %p159 = scmp.lt.s32.totalorder %s21, 0
          %s160 = scalar_select %p159, %s21, 0
          %s161 = sadd.s32 %s160, %s158
          %s162 = smul.addr %s161, 4
          %s163 = scalar_lea.vmem %s0, %s162
          %s164 = smul.u32 8, %s19
        $region16: #{_lambda_.3} parent=11 // pred_fallthru
          _
      $region12: #{_lambda_.3} parent=5 // pred_fallthru
        _
      %p165 = scmp.lt.s32.totalorder %s9, 2
      // Predicated region
      $region17: #{_lambda_.3} parent=5 // pred_check
        %p166 = pneg %p165
      $region18: #{_lambda_.3} parent=5 // pred_check_branch
        %168 = sbr.rel (%p166) target = $region20
      $region19: #{_lambda_.3} parent=5 // pred_region
        // Predicated region
        $region21: #{_lambda_.3} parent=19 // pred_check
          %p169 = pneg %p78
        $region22: #{_lambda_.3} parent=19 // pred_check_branch
          %171 = sbr.rel (%p169) target = $region24
        $region23: #{_lambda_.3} parent=19 // pred_region
          %s172 = sand.u32 %s68, 1
          %s173 = sand.u32 %s68, 1
          %s174 = smul.addr %s173, 128
          %s175 = scalar_lea.vmem [#allocation3], %s174
          %s176 = smul.u32 16, %s18
          %s177 = smul.u32 2, %s17
          %s178 = smul.addr %s176, 4
          %s179 = sadd.s32 %s177, %s178
          %s180 = smul.addr %s179, 4
          %s181 = scalar_lea.vmem %s1, %s180
          // Predicated region
          $region25: #{_lambda_.3} parent=23 // pred_check
            _
          $region26: #{_lambda_.3} parent=23 // pred_check_branch
            %183 = sbr.rel (0) target = $region28
          $region27: #{_lambda_.3} parent=23 // pred_region
            // Predicated region
            $region29: #{_lambda_.3} parent=27 // pred_check
              _
            $region30: #{_lambda_.3} parent=27 // pred_check_branch
              %185 = sbr.rel (0) target = $region32
            $region31: #{_lambda_.3} parent=27 // pred_region
              // Predicated region
              $region44: #{_lambda_.3} parent=31 // pred_check
                _
              $region45: #{_lambda_.3} parent=31 // pred_check_branch
                %230 = sbr.rel (0) target = $region47
              $region46: #{_lambda_.3} parent=31 // pred_region
                loop: start=0, step=1, limit=1
                $region48: #{_lambda_.3} parent=46 // loop_pre_header
                  _
                $region49: #{_lambda_.3} parent=46 // loop_header
                  %s232 = sphi 0, %s236
                  %p233 = scmp.ge.s32.totalorder %s232, 1
                  %s237 = sphi %s181, %s181
                  %s238 = sphi %s175, %s175
                $region50: #{_lambda_.3} parent=46 // loop_header_branch
                  %235 = sbr.rel (%p233) target = $region54
                $region51: #{_lambda_.3} parent=46 // loop_body
                  %v239 = vld [vmem:[%s237] sm:$0xff]
                  %240 = vst [vmem:[%s238] sm:$0xff] %v239
                  %v241 = vld [vmem:[%s237 + $0x10] sm:$0xff]
                  %242 = vst [vmem:[%s238 + $0x8] sm:$0xff] %v241
                  %v243 = vld [vmem:[%s237 + $0x20] sm:$0xff]
                  %244 = vst [vmem:[%s238 + $0x10] sm:$0xff] %v243
                  %v245 = vld [vmem:[%s237 + $0x30] sm:$0xff]
                  %246 = vst [vmem:[%s238 + $0x18] sm:$0xff] %v245
                  %v247 = vld [vmem:[%s237 + $0x40] sm:$0xff]
                  %248 = vst [vmem:[%s238 + $0x20] sm:$0xff] %v247
                  %v249 = vld [vmem:[%s237 + $0x50] sm:$0xff]
                  %250 = vst [vmem:[%s238 + $0x28] sm:$0xff] %v249
                  %v251 = vld [vmem:[%s237 + $0x60] sm:$0xff]
                  %252 = vst [vmem:[%s238 + $0x30] sm:$0xff] %v251
                  %v253 = vld [vmem:[%s237 + $0x70] sm:$0xff]
                  %254 = vst [vmem:[%s238 + $0x38] sm:$0xff] %v253
                  %v255 = vld [vmem:[%s237 + $0x80] sm:$0xff]
                  %256 = vst [vmem:[%s238 + $0x40] sm:$0xff] %v255
                  %v257 = vld [vmem:[%s237 + $0x90] sm:$0xff]
                  %258 = vst [vmem:[%s238 + $0x48] sm:$0xff] %v257
                  %v259 = vld [vmem:[%s237 + $0xa0] sm:$0xff]
                  %260 = vst [vmem:[%s238 + $0x50] sm:$0xff] %v259
                  %v261 = vld [vmem:[%s237 + $0xb0] sm:$0xff]
                  %262 = vst [vmem:[%s238 + $0x58] sm:$0xff] %v261
                  %v263 = vld [vmem:[%s237 + $0xc0] sm:$0xff]
                  %264 = vst [vmem:[%s238 + $0x60] sm:$0xff] %v263
                  %v265 = vld [vmem:[%s237 + $0xd0] sm:$0xff]
                  %266 = vst [vmem:[%s238 + $0x68] sm:$0xff] %v265
                  %v267 = vld [vmem:[%s237 + $0xe0] sm:$0xff]
                  %268 = vst [vmem:[%s238 + $0x70] sm:$0xff] %v267
                  %v269 = vld [vmem:[%s237 + $0xf0] sm:$0xff]
                  %270 = vst [vmem:[%s238 + $0x78] sm:$0xff] %v269
                $region52: #{_lambda_.3} parent=46 // loop_footer
                  %s236 = sadd.s32 1, %s232
                $region53: #{_lambda_.3} parent=46 // loop_footer_branch
                  %231 = sbr.rel target = $region49
                $region54: #{_lambda_.3} parent=46 // loop_exit
                  _
              $region47: #{_lambda_.3} parent=31 // pred_fallthru
                _
              // Predicated region
              $region55: #{_lambda_.3} parent=31 // pred_check
                _
              $region56: #{_lambda_.3} parent=31 // pred_check_branch
                %272 = sbr.rel target = $region58
              $region57: #{_lambda_.3} parent=31 // pred_region
                _
              $region58: #{_lambda_.3} parent=31 // pred_fallthru
                _
            $region32: #{_lambda_.3} parent=27 // pred_fallthru
              _
            // Predicated region
            $region33: #{_lambda_.3} parent=27 // pred_check
              _
            $region34: #{_lambda_.3} parent=27 // pred_check_branch
              %187 = sbr.rel target = $region36
            $region35: #{_lambda_.3} parent=27 // pred_region
              loop: start=0, step=1, limit=1
              $region37: #{_lambda_.3} parent=35 // loop_pre_header
                _
              $region38: #{_lambda_.3} parent=35 // loop_header
                %s190 = sphi 0, %s194
                %p191 = scmp.ge.s32.totalorder %s190, 1
                %s195 = sphi %s181, %s181
                %s196 = sphi %s175, %s175
              $region39: #{_lambda_.3} parent=35 // loop_header_branch
                %193 = sbr.rel (%p191) target = $region43
              $region40: #{_lambda_.3} parent=35 // loop_body
                %v197 = vld [vmem:[%s195] sm:$0xff]
                %198 = vst [vmem:[%s196] sm:$0xff] %v197
                %v199 = vld [vmem:[%s195 + $0x10] sm:$0xff]
                %200 = vst [vmem:[%s196 + $0x8] sm:$0xff] %v199
                %v201 = vld [vmem:[%s195 + $0x20] sm:$0xff]
                %202 = vst [vmem:[%s196 + $0x10] sm:$0xff] %v201
                %v203 = vld [vmem:[%s195 + $0x30] sm:$0xff]
                %204 = vst [vmem:[%s196 + $0x18] sm:$0xff] %v203
                %v205 = vld [vmem:[%s195 + $0x40] sm:$0xff]
                %206 = vst [vmem:[%s196 + $0x20] sm:$0xff] %v205
                %v207 = vld [vmem:[%s195 + $0x50] sm:$0xff]
                %208 = vst [vmem:[%s196 + $0x28] sm:$0xff] %v207
                %v209 = vld [vmem:[%s195 + $0x60] sm:$0xff]
                %210 = vst [vmem:[%s196 + $0x30] sm:$0xff] %v209
                %v211 = vld [vmem:[%s195 + $0x70] sm:$0xff]
                %212 = vst [vmem:[%s196 + $0x38] sm:$0xff] %v211
                %v213 = vld [vmem:[%s195 + $0x80] sm:$0xff]
                %214 = vst [vmem:[%s196 + $0x40] sm:$0xff] %v213
                %v215 = vld [vmem:[%s195 + $0x90] sm:$0xff]
                %216 = vst [vmem:[%s196 + $0x48] sm:$0xff] %v215
                %v217 = vld [vmem:[%s195 + $0xa0] sm:$0xff]
                %218 = vst [vmem:[%s196 + $0x50] sm:$0xff] %v217
                %v219 = vld [vmem:[%s195 + $0xb0] sm:$0xff]
                %220 = vst [vmem:[%s196 + $0x58] sm:$0xff] %v219
                %v221 = vld [vmem:[%s195 + $0xc0] sm:$0xff]
                %222 = vst [vmem:[%s196 + $0x60] sm:$0xff] %v221
                %v223 = vld [vmem:[%s195 + $0xd0] sm:$0xff]
                %224 = vst [vmem:[%s196 + $0x68] sm:$0xff] %v223
                %v225 = vld [vmem:[%s195 + $0xe0] sm:$0xff]
                %226 = vst [vmem:[%s196 + $0x70] sm:$0xff] %v225
                %v227 = vld [vmem:[%s195 + $0xf0] sm:$0xff]
                %228 = vst [vmem:[%s196 + $0x78] sm:$0xff] %v227
              $region41: #{_lambda_.3} parent=35 // loop_footer
                %s194 = sadd.s32 1, %s190
              $region42: #{_lambda_.3} parent=35 // loop_footer_branch
                %189 = sbr.rel target = $region38
              $region43: #{_lambda_.3} parent=35 // loop_exit
                _
            $region36: #{_lambda_.3} parent=27 // pred_fallthru
              _
          $region28: #{_lambda_.3} parent=23 // pred_fallthru
            _
          %273 = vnop
        $region24: #{_lambda_.3} parent=19 // pred_fallthru
          _
        // Predicated region
        $region59: #{_lambda_.3} parent=19 // pred_check
          %p274 = pneg %p104
        $region60: #{_lambda_.3} parent=19 // pred_check_branch
          %276 = sbr.rel (%p274) target = $region62
        $region61: #{_lambda_.3} parent=19 // pred_region
          %s277 = smul.u32 2, %s17
          %p278 = scmp.lt.s32.totalorder %s277, 3
          %s279 = scalar_select %p278, %s277, 3
          %s280 = scalar_lea.vmem %s2, %s279
          %s281 = smul.u32 2, %s17
        $region62: #{_lambda_.3} parent=19 // pred_fallthru
          _
      $region20: #{_lambda_.3} parent=5 // pred_fallthru
        _
      %p282 = scmp.le.s32.totalorder 1, %s9
      %p283 = scmp.lt.s32.totalorder %s9, 3
      %p284 = pnand %p282, %p283
      %p285 = pneg %p284
      // Predicated region
      $region63: #{_lambda_.3} parent=5 // pred_check
        _
      $region64: #{_lambda_.3} parent=5 // pred_check_branch
        %287 = sbr.rel (%p284) target = $region66
      $region65: #{_lambda_.3} parent=5 // pred_region
        %s288 = ssub.s32 %s9, 1
        %s289 = sand.u32 %s71, 1
        %s290 = sand.u32 %s71, 1
        %s291 = smul.addr %s290, 128
        %s292 = scalar_lea.vmem [#allocation3], %s291
        // Predicated region
        $region67: #{_lambda_.3} parent=65 // pred_check
          %p293 = pneg %p84
        $region68: #{_lambda_.3} parent=65 // pred_check_branch
          %295 = sbr.rel (%p293) target = $region70
        $region69: #{_lambda_.3} parent=65 // pred_region
          _
        $region70: #{_lambda_.3} parent=65 // pred_fallthru
          _
        %s296 = smul.u32 8, %s19
        %p297 = scmp.lt.s32.totalorder %s296, 7
        %s298 = scalar_select %p297, %s296, 7
        %p299 = scmp.lt.s32.totalorder %s21, 0
        %s300 = scalar_select %p299, %s21, 0
        %s301 = sadd.s32 %s300, %s298
        %s302 = smul.addr %s301, 4
        %s303 = scalar_lea.vmem %s0, %s302
        %p304 = pneg %p56
        %p305 = pneg %p53
        %s306 = sand.u32 %s71, 1
        %s307 = sand.u32 %s71, 1
        %s308 = smul.addr %s307, 128
        %s309 = scalar_lea.vmem [#allocation3], %s308
        %p310 = pneg %p84
        %p311 = pneg %p81
        %s312 = smul.u32 2, %s20
        %p313 = scmp.lt.s32.totalorder %s312, 3
        %s314 = scalar_select %p313, %s312, 3
        %s315 = scalar_lea.vmem %s2, %s314
        %p316 = pneg %p110
        %p317 = pneg %p107
        %p318 = pneg %p138
        %p319 = pneg %p135
        %s320 = sand.u32 %s125, 1
        %s321 = sand.u32 %s125, 1
        %s322 = smul.addr %s321, 128
        %s323 = scalar_lea.vmem [#allocation4], %s322
        %s324 = smul.u32 8, %s19
        %p325 = scmp.lt.s32.totalorder %s324, 7
        %s326 = scalar_select %p325, %s324, 7
        %p327 = scmp.lt.s32.totalorder %s21, 0
        %s328 = scalar_select %p327, %s21, 0
        %s329 = sadd.s32 %s328, %s326
        %s330 = smul.addr %s329, 4
        %s331 = scalar_lea.vmem %s0, %s330
        %s332 = smul.u32 8, %s19
        %s333 = smul.u32 16, %s21
        %s334 = smul.u32 2, %s20
        %s335 = smul.u32 2, %s20
        %p336 = scmp.lt.s32.totalorder %s335, 3
        %s337 = scalar_select %p336, %s335, 3
        %s338 = scalar_lea.vmem %s2, %s337
        %s339 = smul.u32 2, %s20
        %s340 = smul.u32 8, %s19
        %s341 = smul.u32 2, %s20
        %p343 = scmp.eq.s32.totalorder %s21, 0
        // Predicated region
        $region71: #{_lambda_.3} parent=65 // pred_check
          %p344 = pneg %p343
        $region72: #{_lambda_.3} parent=65 // pred_check_branch
          %346 = sbr.rel (%p344) target = $region74
        $region73: #{_lambda_.3} parent=65 // pred_region
          %347 = vst [vmem:[#allocation2] sm:$0xff] 0.0
          %348 = vst [vmem:[#allocation2 + $0x8] sm:$0xff] 0.0
          %349 = vst [vmem:[#allocation2 + $0x10] sm:$0xff] 0.0
          %350 = vst [vmem:[#allocation2 + $0x18] sm:$0xff] 0.0
          %351 = vst [vmem:[#allocation2 + $0x20] sm:$0xff] 0.0
          %352 = vst [vmem:[#allocation2 + $0x28] sm:$0xff] 0.0
          %353 = vst [vmem:[#allocation2 + $0x30] sm:$0xff] 0.0
          %354 = vst [vmem:[#allocation2 + $0x38] sm:$0xff] 0.0
          %355 = vst [vmem:[#allocation2 + $0x40] sm:$0xff] 0.0
          %356 = vst [vmem:[#allocation2 + $0x48] sm:$0xff] 0.0
          %357 = vst [vmem:[#allocation2 + $0x50] sm:$0xff] 0.0
          %358 = vst [vmem:[#allocation2 + $0x58] sm:$0xff] 0.0
          %359 = vst [vmem:[#allocation2 + $0x60] sm:$0xff] 0.0
          %360 = vst [vmem:[#allocation2 + $0x68] sm:$0xff] 0.0
          %361 = vst [vmem:[#allocation2 + $0x70] sm:$0xff] 0.0
          %362 = vst [vmem:[#allocation2 + $0x78] sm:$0xff] 0.0
        $region74: #{_lambda_.3} parent=65 // pred_fallthru
          _
        %v363 = vld [vmem:[#allocation2] sm:$0xff]
        %v364 = vld [vmem:[#allocation2 + $0x8] sm:$0xff]
        %v365 = vld [vmem:[#allocation2 + $0x10] sm:$0xff]
        %v366 = vld [vmem:[#allocation2 + $0x18] sm:$0xff]
        %v367 = vld [vmem:[#allocation2 + $0x20] sm:$0xff]
        %v368 = vld [vmem:[#allocation2 + $0x28] sm:$0xff]
        %v369 = vld [vmem:[#allocation2 + $0x30] sm:$0xff]
        %v370 = vld [vmem:[#allocation2 + $0x38] sm:$0xff]
        %v371 = vld [vmem:[#allocation2 + $0x40] sm:$0xff]
        %v372 = vld [vmem:[#allocation2 + $0x48] sm:$0xff]
        %v373 = vld [vmem:[#allocation2 + $0x50] sm:$0xff]
        %v374 = vld [vmem:[#allocation2 + $0x58] sm:$0xff]
        %v375 = vld [vmem:[#allocation2 + $0x60] sm:$0xff]
        %v376 = vld [vmem:[#allocation2 + $0x68] sm:$0xff]
        %v377 = vld [vmem:[#allocation2 + $0x70] sm:$0xff]
        %v378 = vld [vmem:[#allocation2 + $0x78] sm:$0xff]
        %v379 = vld [vmem:[%s331] sm:$0xf]
        %v380 = vld [vmem:[%s331 + $0x4] sm:$0xf]
        %v381 = vld [vmem:[%s331 + $0x8] sm:$0xf]
        %v382 = vld [vmem:[%s331 + $0xc] sm:$0xf]
        %v383 = vld [vmem:[%s331 + $0x10] sm:$0xf]
        %v384 = vld [vmem:[%s331 + $0x14] sm:$0xf]
        %v385 = vld [vmem:[%s331 + $0x18] sm:$0xf]
        %v386 = vld [vmem:[%s331 + $0x1c] sm:$0xf]
        %v387 = vld [vmem:[%s292] sm:$0xff]
        %v388 = vld [vmem:[%s292 + $0x8] sm:$0xff]
        %v389 = vld [vmem:[%s292 + $0x10] sm:$0xff]
        %v390 = vld [vmem:[%s292 + $0x18] sm:$0xff]
        %v391 = vld [vmem:[%s292 + $0x20] sm:$0xff]
        %v392 = vld [vmem:[%s292 + $0x28] sm:$0xff]
        %v393 = vld [vmem:[%s292 + $0x30] sm:$0xff]
        %v394 = vld [vmem:[%s292 + $0x38] sm:$0xff]
        %v395 = vld [vmem:[%s292 + $0x40] sm:$0xff]
        %v396 = vld [vmem:[%s292 + $0x48] sm:$0xff]
        %v397 = vld [vmem:[%s292 + $0x50] sm:$0xff]
        %v398 = vld [vmem:[%s292 + $0x58] sm:$0xff]
        %v399 = vld [vmem:[%s292 + $0x60] sm:$0xff]
        %v400 = vld [vmem:[%s292 + $0x68] sm:$0xff]
        %v401 = vld [vmem:[%s292 + $0x70] sm:$0xff]
        %v402 = vld [vmem:[%s292 + $0x78] sm:$0xff]
        %v411 = vunpack.c.l.b16 %v379
        %v412 = vunpack.c.l.b16 %v380
        %v413 = vunpack.c.l.b16 %v381
        %v414 = vunpack.c.l.b16 %v382
        %v415 = vunpack.c.l.b16 %v383
        %v416 = vunpack.c.l.b16 %v384
        %v417 = vunpack.c.l.b16 %v385
        %v418 = vunpack.c.l.b16 %v386
        %v419 = vpack.c.b16 %v412, %v411
        %v420 = vpack.c.b16 %v414, %v413
        %v421 = vpack.c.b16 %v416, %v415
        %v422 = vpack.c.b16 %v418, %v417
        %v443 = vunpack.c.l.b16 %v387
        %v444 = vunpack.c.h.b16 %v387
        %v445 = vunpack.c.l.b16 %v388
        %v446 = vunpack.c.h.b16 %v388
        %v447 = vunpack.c.l.b16 %v389
        %v448 = vunpack.c.h.b16 %v389
        %v449 = vunpack.c.l.b16 %v390
        %v450 = vunpack.c.h.b16 %v390
        %v451 = vunpack.c.l.b16 %v391
        %v452 = vunpack.c.h.b16 %v391
        %v453 = vunpack.c.l.b16 %v392
        %v454 = vunpack.c.h.b16 %v392
        %v455 = vunpack.c.l.b16 %v393
        %v456 = vunpack.c.h.b16 %v393
        %v457 = vunpack.c.l.b16 %v394
        %v458 = vunpack.c.h.b16 %v394
        %v459 = vunpack.c.l.b16 %v395
        %v460 = vunpack.c.h.b16 %v395
        %v461 = vunpack.c.l.b16 %v396
        %v462 = vunpack.c.h.b16 %v396
        %v463 = vunpack.c.l.b16 %v397
        %v464 = vunpack.c.h.b16 %v397
        %v465 = vunpack.c.l.b16 %v398
        %v466 = vunpack.c.h.b16 %v398
        %v467 = vunpack.c.l.b16 %v399
        %v468 = vunpack.c.h.b16 %v399
        %v469 = vunpack.c.l.b16 %v400
        %v470 = vunpack.c.h.b16 %v400
        %v471 = vunpack.c.l.b16 %v401
        %v472 = vunpack.c.h.b16 %v401
        %v473 = vunpack.c.l.b16 %v402
        %v474 = vunpack.c.h.b16 %v402
        %v475 = vpack.c.b16 %v445, %v443
        %v476 = vpack.c.b16 %v446, %v444
        %v477 = vpack.c.b16 %v449, %v447
        %v478 = vpack.c.b16 %v450, %v448
        %v479 = vpack.c.b16 %v453, %v451
        %v480 = vpack.c.b16 %v454, %v452
        %v481 = vpack.c.b16 %v457, %v455
        %v482 = vpack.c.b16 %v458, %v456
        %v483 = vpack.c.b16 %v461, %v459
        %v484 = vpack.c.b16 %v462, %v460
        %v485 = vpack.c.b16 %v465, %v463
        %v486 = vpack.c.b16 %v466, %v464
        %v487 = vpack.c.b16 %v469, %v467
        %v488 = vpack.c.b16 %v470, %v468
        %v489 = vpack.c.b16 %v473, %v471
        %v490 = vpack.c.b16 %v474, %v472
        %507 = vmatprep.subr.bf16.mxu0 %v476
        %508 = vmatpush1.bf16.msra.mxu0 %v475
        %509 = vmatprep.subr.bf16.mxu0 %v478
        %510 = vmatpush1.bf16.msra.mxu0 %v477
        %511 = vmatprep.subr.bf16.mxu0 %v480
        %512 = vmatpush1.bf16.msra.mxu0 %v479
        %513 = vmatprep.subr.bf16.mxu0 %v482
        %514 = vmatpush1.bf16.msra.mxu0 %v481
        %515 = vmatprep.subr.bf16.mxu0 %v484
        %516 = vmatpush1.bf16.msra.mxu0 %v483
        %517 = vmatprep.subr.bf16.mxu0 %v486
        %518 = vmatpush1.bf16.msra.mxu0 %v485
        %519 = vmatprep.subr.bf16.mxu0 %v488
        %520 = vmatpush1.bf16.msra.mxu0 %v487
        %521 = vmatprep.subr.bf16.mxu0 %v490
        %522 = vmatpush1.bf16.msra.mxu0 %v489
        %523 = vmatprep.subr.bf16.mxu0 0
        %524 = vmatpush1.bf16.msra.mxu0 0
        %525 = vmatprep.subr.bf16.mxu0 0
        %526 = vmatpush1.bf16.msra.mxu0 0
        %527 = vmatprep.subr.bf16.mxu0 0
        %528 = vmatpush1.bf16.msra.mxu0 0
        %529 = vmatprep.subr.bf16.mxu0 0
        %530 = vmatpush1.bf16.msra.mxu0 0
        %531 = vmatprep.subr.bf16.mxu0 0
        %532 = vmatpush1.bf16.msra.mxu0 0
        %533 = vmatprep.subr.bf16.mxu0 0
        %534 = vmatpush1.bf16.msra.mxu0 0
        %535 = vmatprep.subr.bf16.mxu0 0
        %536 = vmatpush1.bf16.msra.mxu0 0
        %537 = vmatprep.subr.bf16.mxu0 0
        %538 = vmatpush1.bf16.msra.mxu0 0
        %539 = vmatprep.mubr.bf16.mxu0 0
        %540 = vmatmul.mubr.bf16.gmra.mrb[0].mxu0 %v419
        %v541 = vpop.f32.mrb[0].mxu0
        %v542 = vadd.f32 0.0, %v541
        %v543 = vpop.f32.mrb[0].mxu0
        %v544 = vadd.f32 0.0, %v543
        %v545 = vpop.f32.mrb[0].mxu0
        %v546 = vadd.f32 0.0, %v545
        %v547 = vpop.f32.mrb[0].mxu0
        %v548 = vadd.f32 0.0, %v547
        %549 = vmatprep.mubr.bf16.mxu0 0
        %550 = vmatmul.mubr.bf16.gmra.mrb[0].mxu0 %v420
        %v551 = vpop.f32.mrb[0].mxu0
        %v552 = vadd.f32 0.0, %v551
        %v553 = vpop.f32.mrb[0].mxu0
        %v554 = vadd.f32 0.0, %v553
        %v555 = vpop.f32.mrb[0].mxu0
        %v556 = vadd.f32 0.0, %v555
        %v557 = vpop.f32.mrb[0].mxu0
        %v558 = vadd.f32 0.0, %v557
        %559 = vmatprep.mubr.bf16.mxu0 0
        %560 = vmatmul.mubr.bf16.gmra.mrb[0].mxu0 %v421
        %v561 = vpop.f32.mrb[0].mxu0
        %v562 = vadd.f32 0.0, %v561
        %v563 = vpop.f32.mrb[0].mxu0
        %v564 = vadd.f32 0.0, %v563
        %v565 = vpop.f32.mrb[0].mxu0
        %v566 = vadd.f32 0.0, %v565
        %v567 = vpop.f32.mrb[0].mxu0
        %v568 = vadd.f32 0.0, %v567
        %569 = vmatprep.mubr.bf16.mxu0 0
        %570 = vmatmul.mubr.bf16.gmra.mrb[0].mxu0 %v422
        %v571 = vpop.f32.mrb[0].mxu0
        %v572 = vadd.f32 0.0, %v571
        %v573 = vpop.f32.mrb[0].mxu0
        %v574 = vadd.f32 0.0, %v573
        %v575 = vpop.f32.mrb[0].mxu0
        %v576 = vadd.f32 0.0, %v575
        %v577 = vpop.f32.mrb[0].mxu0
        %v578 = vadd.f32 0.0, %v577
        %579 = vdwg.mxu0
        %v580 = vadd.f32 %v363, %v542
        %v581 = vadd.f32 %v364, %v544
        %v582 = vadd.f32 %v365, %v546
        %v583 = vadd.f32 %v366, %v548
        %v584 = vadd.f32 %v367, %v552
        %v585 = vadd.f32 %v368, %v554
        %v586 = vadd.f32 %v369, %v556
        %v587 = vadd.f32 %v370, %v558
        %v588 = vadd.f32 %v371, %v562
        %v589 = vadd.f32 %v372, %v564
        %v590 = vadd.f32 %v373, %v566
        %v591 = vadd.f32 %v374, %v568
        %v592 = vadd.f32 %v375, %v572
        %v593 = vadd.f32 %v376, %v574
        %v594 = vadd.f32 %v377, %v576
        %v595 = vadd.f32 %v378, %v578
        %596 = vst [vmem:[#allocation2] sm:$0xff] %v580
        %597 = vst [vmem:[#allocation2 + $0x8] sm:$0xff] %v581
        %598 = vst [vmem:[#allocation2 + $0x10] sm:$0xff] %v582
        %599 = vst [vmem:[#allocation2 + $0x18] sm:$0xff] %v583
        %600 = vst [vmem:[#allocation2 + $0x20] sm:$0xff] %v584
        %601 = vst [vmem:[#allocation2 + $0x28] sm:$0xff] %v585
        %602 = vst [vmem:[#allocation2 + $0x30] sm:$0xff] %v586
        %603 = vst [vmem:[#allocation2 + $0x38] sm:$0xff] %v587
        %604 = vst [vmem:[#allocation2 + $0x40] sm:$0xff] %v588
        %605 = vst [vmem:[#allocation2 + $0x48] sm:$0xff] %v589
        %606 = vst [vmem:[#allocation2 + $0x50] sm:$0xff] %v590
        %607 = vst [vmem:[#allocation2 + $0x58] sm:$0xff] %v591
        %608 = vst [vmem:[#allocation2 + $0x60] sm:$0xff] %v592
        %609 = vst [vmem:[#allocation2 + $0x68] sm:$0xff] %v593
        %610 = vst [vmem:[#allocation2 + $0x70] sm:$0xff] %v594
        %611 = vst [vmem:[#allocation2 + $0x78] sm:$0xff] %v595
        // Predicated region
        $region75: #{_lambda_.3} parent=65 // pred_check
          %p612 = pneg %p343
        $region76: #{_lambda_.3} parent=65 // pred_check_branch
          %614 = sbr.rel (%p612) target = $region78
        $region77: #{_lambda_.3} parent=65 // pred_region
          %v615 = vld [vmem:[#allocation2] sm:$0xff]
          %v616 = vld [vmem:[#allocation2 + $0x8] sm:$0xff]
          %v617 = vld [vmem:[#allocation2 + $0x10] sm:$0xff]
          %v618 = vld [vmem:[#allocation2 + $0x18] sm:$0xff]
          %v619 = vld [vmem:[#allocation2 + $0x20] sm:$0xff]
          %v620 = vld [vmem:[#allocation2 + $0x28] sm:$0xff]
          %v621 = vld [vmem:[#allocation2 + $0x30] sm:$0xff]
          %v622 = vld [vmem:[#allocation2 + $0x38] sm:$0xff]
          %v623 = vld [vmem:[#allocation2 + $0x40] sm:$0xff]
          %v624 = vld [vmem:[#allocation2 + $0x48] sm:$0xff]
          %v625 = vld [vmem:[#allocation2 + $0x50] sm:$0xff]
          %v626 = vld [vmem:[#allocation2 + $0x58] sm:$0xff]
          %v627 = vld [vmem:[#allocation2 + $0x60] sm:$0xff]
          %v628 = vld [vmem:[#allocation2 + $0x68] sm:$0xff]
          %v629 = vld [vmem:[#allocation2 + $0x70] sm:$0xff]
          %v630 = vld [vmem:[#allocation2 + $0x78] sm:$0xff]
          %v631 = vld [vmem:[%s338] sm:$0x3]
          %v633 = vlaneseq
          %v634 = vshrl.u32 %v633, 7
          %v635 = vsub.s32 0, %v634
          %v636 = vrot.slane %v631, %v635
          %v637 = vlaneseq
          %v638 = vshrl.u32 %v637, 7
          %v639 = vsub.s32 1, %v638
          %v640 = vrot.slane %v631, %v639
          %v643 = vadd.f32 %v615, %v636
          %v644 = vadd.f32 %v616, %v640
          %v645 = vadd.f32 %v617, %v636
          %v646 = vadd.f32 %v618, %v640
          %v647 = vadd.f32 %v619, %v636
          %v648 = vadd.f32 %v620, %v640
          %v649 = vadd.f32 %v621, %v636
          %v650 = vadd.f32 %v622, %v640
          %v651 = vadd.f32 %v623, %v636
          %v652 = vadd.f32 %v624, %v640
          %v653 = vadd.f32 %v625, %v636
          %v654 = vadd.f32 %v626, %v640
          %v655 = vadd.f32 %v627, %v636
          %v656 = vadd.f32 %v628, %v640
          %v657 = vadd.f32 %v629, %v636
          %v658 = vadd.f32 %v630, %v640
          %659 = vst [vmem:[%s323] sm:$0xff] %v643
          %660 = vst [vmem:[%s323 + $0x8] sm:$0xff] %v644
          %661 = vst [vmem:[%s323 + $0x10] sm:$0xff] %v645
          %662 = vst [vmem:[%s323 + $0x18] sm:$0xff] %v646
          %663 = vst [vmem:[%s323 + $0x20] sm:$0xff] %v647
          %664 = vst [vmem:[%s323 + $0x28] sm:$0xff] %v648
          %665 = vst [vmem:[%s323 + $0x30] sm:$0xff] %v649
          %666 = vst [vmem:[%s323 + $0x38] sm:$0xff] %v650
          %667 = vst [vmem:[%s323 + $0x40] sm:$0xff] %v651
          %668 = vst [vmem:[%s323 + $0x48] sm:$0xff] %v652
          %669 = vst [vmem:[%s323 + $0x50] sm:$0xff] %v653
          %670 = vst [vmem:[%s323 + $0x58] sm:$0xff] %v654
          %671 = vst [vmem:[%s323 + $0x60] sm:$0xff] %v655
          %672 = vst [vmem:[%s323 + $0x68] sm:$0xff] %v656
          %673 = vst [vmem:[%s323 + $0x70] sm:$0xff] %v657
          %674 = vst [vmem:[%s323 + $0x78] sm:$0xff] %v658
        $region78: #{_lambda_.3} parent=65 // pred_fallthru
          _
        %s675 = sand.u32 %s125, 1
        %s676 = sand.u32 %s125, 1
        %s677 = smul.addr %s676, 128
        %s678 = scalar_lea.vmem [#allocation4], %s677
        // Predicated region
        $region79: #{_lambda_.3} parent=65 // pred_check
          %p679 = pneg %p135
        $region80: #{_lambda_.3} parent=65 // pred_check_branch
          %681 = sbr.rel (%p679) target = $region82
        $region81: #{_lambda_.3} parent=65 // pred_region
          %s682 = smul.u32 8, %s19
          %s683 = smul.u32 2, %s20
          %s684 = smul.addr %s682, 4
          %s685 = sadd.s32 %s683, %s684
          %s686 = smul.addr %s685, 8
          %s687 = scalar_lea.vmem %s3, %s686
          // Predicated region
          $region83: #{_lambda_.3} parent=81 // pred_check
            _
          $region84: #{_lambda_.3} parent=81 // pred_check_branch
            %689 = sbr.rel (0) target = $region86
          $region85: #{_lambda_.3} parent=81 // pred_region
            // Predicated region
            $region87: #{_lambda_.3} parent=85 // pred_check
              _
            $region88: #{_lambda_.3} parent=85 // pred_check_branch
              %691 = sbr.rel (0) target = $region90
            $region89: #{_lambda_.3} parent=85 // pred_region
              loop: start=0, step=1, limit=1
              $region91: #{_lambda_.3} parent=89 // loop_pre_header
                _
              $region92: #{_lambda_.3} parent=89 // loop_header
                %s693 = sphi 0, %s697
                %p694 = scmp.ge.s32.totalorder %s693, 1
                %s698 = sphi %s678, %s678
                %s699 = sphi %s687, %s687
              $region93: #{_lambda_.3} parent=89 // loop_header_branch
                %696 = sbr.rel (%p694) target = $region97
              $region94: #{_lambda_.3} parent=89 // loop_body
                %v700 = vld [vmem:[%s698] sm:$0xff]
                %701 = vst [vmem:[%s699] sm:$0xff] %v700
                %v702 = vld [vmem:[%s698 + $0x8] sm:$0xff]
                %703 = vst [vmem:[%s699 + $0x8] sm:$0xff] %v702
                %v704 = vld [vmem:[%s698 + $0x10] sm:$0xff]
                %705 = vst [vmem:[%s699 + $0x20] sm:$0xff] %v704
                %v706 = vld [vmem:[%s698 + $0x18] sm:$0xff]
                %707 = vst [vmem:[%s699 + $0x28] sm:$0xff] %v706
                %v708 = vld [vmem:[%s698 + $0x20] sm:$0xff]
                %709 = vst [vmem:[%s699 + $0x40] sm:$0xff] %v708
                %v710 = vld [vmem:[%s698 + $0x28] sm:$0xff]
                %711 = vst [vmem:[%s699 + $0x48] sm:$0xff] %v710
                %v712 = vld [vmem:[%s698 + $0x30] sm:$0xff]
                %713 = vst [vmem:[%s699 + $0x60] sm:$0xff] %v712
                %v714 = vld [vmem:[%s698 + $0x38] sm:$0xff]
                %715 = vst [vmem:[%s699 + $0x68] sm:$0xff] %v714
                %v716 = vld [vmem:[%s698 + $0x40] sm:$0xff]
                %717 = vst [vmem:[%s699 + $0x80] sm:$0xff] %v716
                %v718 = vld [vmem:[%s698 + $0x48] sm:$0xff]
                %719 = vst [vmem:[%s699 + $0x88] sm:$0xff] %v718
                %v720 = vld [vmem:[%s698 + $0x50] sm:$0xff]
                %721 = vst [vmem:[%s699 + $0xa0] sm:$0xff] %v720
                %v722 = vld [vmem:[%s698 + $0x58] sm:$0xff]
                %723 = vst [vmem:[%s699 + $0xa8] sm:$0xff] %v722
                %v724 = vld [vmem:[%s698 + $0x60] sm:$0xff]
                %725 = vst [vmem:[%s699 + $0xc0] sm:$0xff] %v724
                %v726 = vld [vmem:[%s698 + $0x68] sm:$0xff]
                %727 = vst [vmem:[%s699 + $0xc8] sm:$0xff] %v726
                %v728 = vld [vmem:[%s698 + $0x70] sm:$0xff]
                %729 = vst [vmem:[%s699 + $0xe0] sm:$0xff] %v728
                %v730 = vld [vmem:[%s698 + $0x78] sm:$0xff]
                %731 = vst [vmem:[%s699 + $0xe8] sm:$0xff] %v730
              $region95: #{_lambda_.3} parent=89 // loop_footer
                %s697 = sadd.s32 1, %s693
              $region96: #{_lambda_.3} parent=89 // loop_footer_branch
                %692 = sbr.rel target = $region92
              $region97: #{_lambda_.3} parent=89 // loop_exit
                _
            $region90: #{_lambda_.3} parent=85 // pred_fallthru
              _
            // Predicated region
            $region98: #{_lambda_.3} parent=85 // pred_check
              _
            $region99: #{_lambda_.3} parent=85 // pred_check_branch
              %733 = sbr.rel target = $region101
            $region100: #{_lambda_.3} parent=85 // pred_region
              _
            $region101: #{_lambda_.3} parent=85 // pred_fallthru
              _
          $region86: #{_lambda_.3} parent=81 // pred_fallthru
            _
          %734 = vnop
        $region82: #{_lambda_.3} parent=65 // pred_fallthru
          _
      $region66: #{_lambda_.3} parent=5 // pred_fallthru
        _
      %p735 = scmp.le.s32.totalorder 2, %s9
      // Predicated region
      $region102: #{_lambda_.3} parent=5 // pred_check
        %p736 = pneg %p735
      $region103: #{_lambda_.3} parent=5 // pred_check_branch
        %738 = sbr.rel (%p736) target = $region105
      $region104: #{_lambda_.3} parent=5 // pred_region
        %s739 = ssub.s32 %s9, 2
        // Predicated region
        $region106: #{_lambda_.3} parent=104 // pred_check
          %p740 = pneg %p141
        $region107: #{_lambda_.3} parent=104 // pred_check_branch
          %742 = sbr.rel (%p740) target = $region109
        $region108: #{_lambda_.3} parent=104 // pred_region
          %s743 = sand.u32 %s126, 1
          %s744 = sand.u32 %s126, 1
          %s745 = smul.addr %s744, 128
          %s746 = scalar_lea.vmem [#allocation4], %s745
        $region109: #{_lambda_.3} parent=104 // pred_fallthru
          _
      $region105: #{_lambda_.3} parent=5 // pred_fallthru
        _
    $region6: #{_lambda_.3} parent=1 // loop_footer
      %s13 = sadd.s32 1, %s9
    $region7: #{_lambda_.3} parent=1 // loop_footer_branch
      %8 = sbr.rel target = $region3
    $region8: #{_lambda_.3} parent=1 // loop_exit
      _

// kernel: _lambda_.4
$region0: #{_lambda_.4}
  #allocation0 [shape = 'u32[]', space=smem, size = 0x4, offset = 0x4, fixed_abs, tag = 'smem constant byte address 0x4 - core index']
  #allocation1 [shape = 'u32[144,128]{1,0:T(1,128)}', space=vmem, size = 0x12000, scoped, tag = 'internal scratch']
  #allocation2 [shape = 'f32[8,128]{1,0:T(8,128)}', space=vmem, size = 0x1000, scoped, tag = 'scratch operand']
  #allocation3 [shape = 'f32[8,128]{1,0:T(8,128)}', space=vmem, size = 0x1000, scoped, tag = 'scratch operand']
  %s0 = inlined_call_operand.vmem [shape: f32[8,8,512], index: 0, kind: input, shape index: {}]
  %s1 = inlined_call_operand.vmem [shape: bf16[128,512], index: 1, kind: input, shape index: {}]
  %s2 = inlined_call_operand.vmem [shape: f32[8,8,128], index: 2, kind: output, shape index: {}]
  %s3 = sld [smem:[#allocation0]]
  $region22: #{_lambda_.4} parent=0
    _
  %s5 = ssub.s32 1, %s3
  %s6 = scalar_select 0, %s5, %s3
  // Predicated region
  $region2: #{_lambda_.4} parent=0 // pred_check
    _
  $region3: #{_lambda_.4} parent=0 // pred_check_branch
    %8 = sbr.rel (0) target = $region5
  $region4: #{_lambda_.4} parent=0 // pred_region
    _
  $region5: #{_lambda_.4} parent=0 // pred_fallthru
    _
  // Predicated region
  $region6: #{_lambda_.4} parent=0 // pred_check
    _
  $region7: #{_lambda_.4} parent=0 // pred_check_branch
    %10 = sbr.rel (0) target = $region9
  $region8: #{_lambda_.4} parent=0 // pred_region
    _
  $region9: #{_lambda_.4} parent=0 // pred_fallthru
    _
  %p12 = scmp.eq.s32.totalorder 0, 0
  // Predicated region
  $region10: #{_lambda_.4} parent=0 // pred_check
    %p13 = pneg %p12
  $region11: #{_lambda_.4} parent=0 // pred_check_branch
    %15 = sbr.rel (%p13) target = $region13
  $region12: #{_lambda_.4} parent=0 // pred_region
    %16 = vst [vmem:[#allocation2] sm:$0xff] 0.0
    %17 = vst [vmem:[#allocation3] sm:$0xff] 0.0
  $region13: #{_lambda_.4} parent=0 // pred_fallthru
    _
  %v18 = vld [vmem:[%s1] sm:$0xff]
  %v19 = vld [vmem:[%s1 + $0x8] sm:$0xff]
  %v20 = vld [vmem:[%s1 + $0x10] sm:$0xff]
  %v21 = vld [vmem:[%s1 + $0x18] sm:$0xff]
  %v22 = vld [vmem:[%s1 + $0x20] sm:$0xff]
  %v23 = vld [vmem:[%s1 + $0x28] sm:$0xff]
  %v24 = vld [vmem:[%s1 + $0x30] sm:$0xff]
  %v25 = vld [vmem:[%s1 + $0x38] sm:$0xff]
  %v26 = vld [vmem:[%s1 + $0x40] sm:$0xff]
  %v27 = vld [vmem:[%s1 + $0x48] sm:$0xff]
  %v28 = vld [vmem:[%s1 + $0x50] sm:$0xff]
  %v29 = vld [vmem:[%s1 + $0x58] sm:$0xff]
  %v30 = vld [vmem:[%s1 + $0x60] sm:$0xff]
  %v31 = vld [vmem:[%s1 + $0x68] sm:$0xff]
  %v32 = vld [vmem:[%s1 + $0x70] sm:$0xff]
  %v33 = vld [vmem:[%s1 + $0x78] sm:$0xff]
  %v34 = vld [vmem:[%s1 + $0x80] sm:$0xff]
  %v35 = vld [vmem:[%s1 + $0x88] sm:$0xff]
  %v36 = vld [vmem:[%s1 + $0x90] sm:$0xff]
  %v37 = vld [vmem:[%s1 + $0x98] sm:$0xff]
  %v38 = vld [vmem:[%s1 + $0xa0] sm:$0xff]
  %v39 = vld [vmem:[%s1 + $0xa8] sm:$0xff]
  %v40 = vld [vmem:[%s1 + $0xb0] sm:$0xff]
  %v41 = vld [vmem:[%s1 + $0xb8] sm:$0xff]
  %v42 = vld [vmem:[%s1 + $0xc0] sm:$0xff]
  %v43 = vld [vmem:[%s1 + $0xc8] sm:$0xff]
  %v44 = vld [vmem:[%s1 + $0xd0] sm:$0xff]
  %v45 = vld [vmem:[%s1 + $0xd8] sm:$0xff]
  %v46 = vld [vmem:[%s1 + $0xe0] sm:$0xff]
  %v47 = vld [vmem:[%s1 + $0xe8] sm:$0xff]
  %v48 = vld [vmem:[%s1 + $0xf0] sm:$0xff]
  %v49 = vld [vmem:[%s1 + $0xf8] sm:$0xff]
  %v50 = vld [vmem:[#allocation2] sm:$0xff]
  %v51 = vld [vmem:[#allocation3] sm:$0xff]
  %v52 = vld [vmem:[%s0] sm:$0xff]
  %v53 = vld [vmem:[%s0 + $0x8] sm:$0xff]
  %v54 = vld [vmem:[%s0 + $0x10] sm:$0xff]
  %v55 = vld [vmem:[%s0 + $0x18] sm:$0xff]
  %v56 = vpack.c.bf16 %v50, %v50
  %v89 = vunpack.c.l.b16 %v18
  %v90 = vunpack.c.h.b16 %v18
  %v91 = vunpack.c.l.b16 %v19
  %v92 = vunpack.c.h.b16 %v19
  %v93 = vunpack.c.l.b16 %v20
  %v94 = vunpack.c.h.b16 %v20
  %v95 = vunpack.c.l.b16 %v21
  %v96 = vunpack.c.h.b16 %v21
  %v97 = vunpack.c.l.b16 %v22
  %v98 = vunpack.c.h.b16 %v22
  %v99 = vunpack.c.l.b16 %v23
  %v100 = vunpack.c.h.b16 %v23
  %v101 = vunpack.c.l.b16 %v24
  %v102 = vunpack.c.h.b16 %v24
  %v103 = vunpack.c.l.b16 %v25
  %v104 = vunpack.c.h.b16 %v25
  %v105 = vunpack.c.l.b16 %v26
  %v106 = vunpack.c.h.b16 %v26
  %v107 = vunpack.c.l.b16 %v27
  %v108 = vunpack.c.h.b16 %v27
  %v109 = vunpack.c.l.b16 %v28
  %v110 = vunpack.c.h.b16 %v28
  %v111 = vunpack.c.l.b16 %v29
  %v112 = vunpack.c.h.b16 %v29
  %v113 = vunpack.c.l.b16 %v30
  %v114 = vunpack.c.h.b16 %v30
  %v115 = vunpack.c.l.b16 %v31
  %v116 = vunpack.c.h.b16 %v31
  %v117 = vunpack.c.l.b16 %v32
  %v118 = vunpack.c.h.b16 %v32
  %v119 = vunpack.c.l.b16 %v33
  %v120 = vunpack.c.h.b16 %v33
  %v121 = vunpack.c.l.b16 %v34
  %v122 = vunpack.c.h.b16 %v34
  %v123 = vunpack.c.l.b16 %v35
  %v124 = vunpack.c.h.b16 %v35
  %v125 = vunpack.c.l.b16 %v36
  %v126 = vunpack.c.h.b16 %v36
  %v127 = vunpack.c.l.b16 %v37
  %v128 = vunpack.c.h.b16 %v37
  %v129 = vunpack.c.l.b16 %v38
  %v130 = vunpack.c.h.b16 %v38
  %v131 = vunpack.c.l.b16 %v39
  %v132 = vunpack.c.h.b16 %v39
  %v133 = vunpack.c.l.b16 %v40
  %v134 = vunpack.c.h.b16 %v40
  %v135 = vunpack.c.l.b16 %v41
  %v136 = vunpack.c.h.b16 %v41
  %v137 = vunpack.c.l.b16 %v42
  %v138 = vunpack.c.h.b16 %v42
  %v139 = vunpack.c.l.b16 %v43
  %v140 = vunpack.c.h.b16 %v43
  %v141 = vunpack.c.l.b16 %v44
  %v142 = vunpack.c.h.b16 %v44
  %v143 = vunpack.c.l.b16 %v45
  %v144 = vunpack.c.h.b16 %v45
  %v145 = vunpack.c.l.b16 %v46
  %v146 = vunpack.c.h.b16 %v46
  %v147 = vunpack.c.l.b16 %v47
  %v148 = vunpack.c.h.b16 %v47
  %v149 = vunpack.c.l.b16 %v48
  %v150 = vunpack.c.h.b16 %v48
  %v151 = vunpack.c.l.b16 %v49
  %v152 = vunpack.c.h.b16 %v49
  %v153 = vpack.c.b16 %v93, %v89
  %v154 = vpack.c.b16 %v94, %v90
  %v155 = vpack.c.b16 %v95, %v91
  %v156 = vpack.c.b16 %v96, %v92
  %v157 = vpack.c.b16 %v101, %v97
  %v158 = vpack.c.b16 %v102, %v98
  %v159 = vpack.c.b16 %v103, %v99
  %v160 = vpack.c.b16 %v104, %v100
  %v161 = vpack.c.b16 %v109, %v105
  %v162 = vpack.c.b16 %v110, %v106
  %v163 = vpack.c.b16 %v111, %v107
  %v164 = vpack.c.b16 %v112, %v108
  %v165 = vpack.c.b16 %v117, %v113
  %v166 = vpack.c.b16 %v118, %v114
  %v167 = vpack.c.b16 %v119, %v115
  %v168 = vpack.c.b16 %v120, %v116
  %v169 = vpack.c.b16 %v125, %v121
  %v170 = vpack.c.b16 %v126, %v122
  %v171 = vpack.c.b16 %v127, %v123
  %v172 = vpack.c.b16 %v128, %v124
  %v173 = vpack.c.b16 %v133, %v129
  %v174 = vpack.c.b16 %v134, %v130
  %v175 = vpack.c.b16 %v135, %v131
  %v176 = vpack.c.b16 %v136, %v132
  %v177 = vpack.c.b16 %v141, %v137
  %v178 = vpack.c.b16 %v142, %v138
  %v179 = vpack.c.b16 %v143, %v139
  %v180 = vpack.c.b16 %v144, %v140
  %v181 = vpack.c.b16 %v149, %v145
  %v182 = vpack.c.b16 %v150, %v146
  %v183 = vpack.c.b16 %v151, %v147
  %v184 = vpack.c.b16 %v152, %v148
  %217 = vmatprep.subr.bf16.mxu0 %v154
  %218 = vmatpush1.bf16.msra.mxu0 %v153
  %219 = vmatprep.subr.bf16.mxu0 %v158
  %220 = vmatpush1.bf16.msra.mxu0 %v157
  %221 = vmatprep.subr.bf16.mxu0 %v162
  %222 = vmatpush1.bf16.msra.mxu0 %v161
  %223 = vmatprep.subr.bf16.mxu0 %v166
  %224 = vmatpush1.bf16.msra.mxu0 %v165
  %225 = vmatprep.subr.bf16.mxu0 %v170
  %226 = vmatpush1.bf16.msra.mxu0 %v169
  %227 = vmatprep.subr.bf16.mxu0 %v174
  %228 = vmatpush1.bf16.msra.mxu0 %v173
  %229 = vmatprep.subr.bf16.mxu0 %v178
  %230 = vmatpush1.bf16.msra.mxu0 %v177
  %231 = vmatprep.subr.bf16.mxu0 %v182
  %232 = vmatpush1.bf16.msra.mxu0 %v181
  %233 = vmatprep.subr.bf16.mxu0 0
  %234 = vmatpush1.bf16.msra.mxu0 0
  %235 = vmatprep.subr.bf16.mxu0 0
  %236 = vmatpush1.bf16.msra.mxu0 0
  %237 = vmatprep.subr.bf16.mxu0 0
  %238 = vmatpush1.bf16.msra.mxu0 0
  %239 = vmatprep.subr.bf16.mxu0 0
  %240 = vmatpush1.bf16.msra.mxu0 0
  %241 = vmatprep.subr.bf16.mxu0 0
  %242 = vmatpush1.bf16.msra.mxu0 0
  %243 = vmatprep.subr.bf16.mxu0 0
  %244 = vmatpush1.bf16.msra.mxu0 0
  %245 = vmatprep.subr.bf16.mxu0 0
  %246 = vmatpush1.bf16.msra.mxu0 0
  %247 = vmatprep.subr.bf16.mxu0 0
  %248 = vmatpush1.bf16.msra.mxu0 0
  %249 = vmatprep.mubr.bf16.mxu0 0
  %250 = vmatmul.mubr.bf16.gmra.mrb[0].mxu0 %v56
  %v251 = vpop.f32.mrb[0].mxu0
  %v252 = vadd.f32 0.0, %v251
  %v253 = vpop.f32.mrb[0].mxu0
  %v254 = vadd.f32 0.0, %v253
  %v255 = vpop.f32.mrb[0].mxu0
  %v256 = vpop.f32.mrb[0].mxu0
  %257 = vdwg.mxu0
  %258 = vmatprep.subr.bf16.mxu0 %v156
  %259 = vmatpush1.bf16.msra.mxu0 %v155
  %260 = vmatprep.subr.bf16.mxu0 %v160
  %261 = vmatpush1.bf16.msra.mxu0 %v159
  %262 = vmatprep.subr.bf16.mxu0 %v164
  %263 = vmatpush1.bf16.msra.mxu0 %v163
  %264 = vmatprep.subr.bf16.mxu0 %v168
  %265 = vmatpush1.bf16.msra.mxu0 %v167
  %266 = vmatprep.subr.bf16.mxu0 %v172
  %267 = vmatpush1.bf16.msra.mxu0 %v171
  %268 = vmatprep.subr.bf16.mxu0 %v176
  %269 = vmatpush1.bf16.msra.mxu0 %v175
  %270 = vmatprep.subr.bf16.mxu0 %v180
  %271 = vmatpush1.bf16.msra.mxu0 %v179
  %272 = vmatprep.subr.bf16.mxu0 %v184
  %273 = vmatpush1.bf16.msra.mxu0 %v183
  %274 = vmatprep.subr.bf16.mxu0 0
  %275 = vmatpush1.bf16.msra.mxu0 0
  %276 = vmatprep.subr.bf16.mxu0 0
  %277 = vmatpush1.bf16.msra.mxu0 0
  %278 = vmatprep.subr.bf16.mxu0 0
  %279 = vmatpush1.bf16.msra.mxu0 0
  %280 = vmatprep.subr.bf16.mxu0 0
  %281 = vmatpush1.bf16.msra.mxu0 0
  %282 = vmatprep.subr.bf16.mxu0 0
  %283 = vmatpush1.bf16.msra.mxu0 0
  %284 = vmatprep.subr.bf16.mxu0 0
  %285 = vmatpush1.bf16.msra.mxu0 0
  %286 = vmatprep.subr.bf16.mxu0 0
  %287 = vmatpush1.bf16.msra.mxu0 0
  %288 = vmatprep.subr.bf16.mxu0 0
  %289 = vmatpush1.bf16.msra.mxu0 0
  %290 = vmatprep.mubr.bf16.mxu0 0
  %291 = vmatmul.mubr.bf16.gmra.mrb[0].mxu0 %v56
  %v292 = vpop.f32.mrb[0].mxu0
  %v293 = vadd.f32 0.0, %v292
  %v294 = vpop.f32.mrb[0].mxu0
  %v295 = vadd.f32 0.0, %v294
  %v296 = vpop.f32.mrb[0].mxu0
  %v297 = vpop.f32.mrb[0].mxu0
  %298 = vdwg.mxu0
  %v299 = vadd.f32 %v52, %v252
  %v300 = vadd.f32 %v53, %v254
  %v301 = vadd.f32 %v54, %v293
  %v302 = vadd.f32 %v55, %v295
  %v303 = vxor.u32 %v299, 2147483648
  %v304 = vmul.f32 %v303, 1.442695
  %v305 = vpow.pop %v304
  %v306 = vadd.f32 %v305, 1.0
  %v307 = vrcp.pop %v306
  %v308 = vmul.f32 1.0, %v307
  %v309 = vxor.u32 %v300, 2147483648
  %v310 = vmul.f32 %v309, 1.442695
  %v311 = vpow.pop %v310
  %v312 = vadd.f32 %v311, 1.0
  %v313 = vrcp.pop %v312
  %v314 = vmul.f32 1.0, %v313
  %v315 = vtanh.pop %v301
  %v316 = vxor.u32 %v302, 2147483648
  %v317 = vmul.f32 %v316, 1.442695
  %v318 = vpow.pop %v317
  %v319 = vadd.f32 %v318, 1.0
  %v320 = vrcp.pop %v319
  %v321 = vmul.f32 1.0, %v320
  %v322 = vmul.f32 %v314, %v51
  %v323 = vmul.f32 %v308, %v315
  %v324 = vadd.f32 %v322, %v323
  %v325 = vtanh.pop %v324
  %v326 = vmul.f32 %v321, %v325
  %327 = vst [vmem:[%s2] sm:$0xff] %v326
  %s328 = scalar_lea.vmem %s0, 32
  %v329 = vld [vmem:[%s328] sm:$0xff]
  %v330 = vld [vmem:[%s328 + $0x8] sm:$0xff]
  %v331 = vld [vmem:[%s328 + $0x10] sm:$0xff]
  %v332 = vld [vmem:[%s328 + $0x18] sm:$0xff]
  %v333 = vpack.c.bf16 %v326, %v326
  %334 = vmatprep.subr.bf16.mxu0 %v154
  %335 = vmatpush1.bf16.msra.mxu0 %v153
  %336 = vmatprep.subr.bf16.mxu0 %v158
  %337 = vmatpush1.bf16.msra.mxu0 %v157
  %338 = vmatprep.subr.bf16.mxu0 %v162
  %339 = vmatpush1.bf16.msra.mxu0 %v161
  %340 = vmatprep.subr.bf16.mxu0 %v166
  %341 = vmatpush1.bf16.msra.mxu0 %v165
  %342 = vmatprep.subr.bf16.mxu0 %v170
  %343 = vmatpush1.bf16.msra.mxu0 %v169
  %344 = vmatprep.subr.bf16.mxu0 %v174
  %345 = vmatpush1.bf16.msra.mxu0 %v173
  %346 = vmatprep.subr.bf16.mxu0 %v178
  %347 = vmatpush1.bf16.msra.mxu0 %v177
  %348 = vmatprep.subr.bf16.mxu0 %v182
  %349 = vmatpush1.bf16.msra.mxu0 %v181
  %350 = vmatprep.subr.bf16.mxu0 0
  %351 = vmatpush1.bf16.msra.mxu0 0
  %352 = vmatprep.subr.bf16.mxu0 0
  %353 = vmatpush1.bf16.msra.mxu0 0
  %354 = vmatprep.subr.bf16.mxu0 0
  %355 = vmatpush1.bf16.msra.mxu0 0
  %356 = vmatprep.subr.bf16.mxu0 0
  %357 = vmatpush1.bf16.msra.mxu0 0
  %358 = vmatprep.subr.bf16.mxu0 0
  %359 = vmatpush1.bf16.msra.mxu0 0
  %360 = vmatprep.subr.bf16.mxu0 0
  %361 = vmatpush1.bf16.msra.mxu0 0
  %362 = vmatprep.subr.bf16.mxu0 0
  %363 = vmatpush1.bf16.msra.mxu0 0
  %364 = vmatprep.subr.bf16.mxu0 0
  %365 = vmatpush1.bf16.msra.mxu0 0
  %366 = vmatprep.mubr.bf16.mxu0 0
  %367 = vmatmul.mubr.bf16.gmra.mrb[0].mxu0 %v333
  %v368 = vpop.f32.mrb[0].mxu0
  %v369 = vadd.f32 0.0, %v368
  %v370 = vpop.f32.mrb[0].mxu0
  %v371 = vadd.f32 0.0, %v370
  %v372 = vpop.f32.mrb[0].mxu0
  %v373 = vpop.f32.mrb[0].mxu0
  %374 = vdwg.mxu0
  %375 = vmatprep.subr.bf16.mxu0 %v156
  %376 = vmatpush1.bf16.msra.mxu0 %v155
  %377 = vmatprep.subr.bf16.mxu0 %v160
  %378 = vmatpush1.bf16.msra.mxu0 %v159
  %379 = vmatprep.subr.bf16.mxu0 %v164
  %380 = vmatpush1.bf16.msra.mxu0 %v163
  %381 = vmatprep.subr.bf16.mxu0 %v168
  %382 = vmatpush1.bf16.msra.mxu0 %v167
  %383 = vmatprep.subr.bf16.mxu0 %v172
  %384 = vmatpush1.bf16.msra.mxu0 %v171
  %385 = vmatprep.subr.bf16.mxu0 %v176
  %386 = vmatpush1.bf16.msra.mxu0 %v175
  %387 = vmatprep.subr.bf16.mxu0 %v180
  %388 = vmatpush1.bf16.msra.mxu0 %v179
  %389 = vmatprep.subr.bf16.mxu0 %v184
  %390 = vmatpush1.bf16.msra.mxu0 %v183
  %391 = vmatprep.subr.bf16.mxu0 0
  %392 = vmatpush1.bf16.msra.mxu0 0
  %393 = vmatprep.subr.bf16.mxu0 0
  %394 = vmatpush1.bf16.msra.mxu0 0
  %395 = vmatprep.subr.bf16.mxu0 0
  %396 = vmatpush1.bf16.msra.mxu0 0
  %397 = vmatprep.subr.bf16.mxu0 0
  %398 = vmatpush1.bf16.msra.mxu0 0
  %399 = vmatprep.subr.bf16.mxu0 0
  %400 = vmatpush1.bf16.msra.mxu0 0
  %401 = vmatprep.subr.bf16.mxu0 0
  %402 = vmatpush1.bf16.msra.mxu0 0
  %403 = vmatprep.subr.bf16.mxu0 0
  %404 = vmatpush1.bf16.msra.mxu0 0
  %405 = vmatprep.subr.bf16.mxu0 0
  %406 = vmatpush1.bf16.msra.mxu0 0
  %407 = vmatprep.mubr.bf16.mxu0 0
  %408 = vmatmul.mubr.bf16.gmra.mrb[0].mxu0 %v333
  %v409 = vpop.f32.mrb[0].mxu0
  %v410 = vadd.f32 0.0, %v409
  %v411 = vpop.f32.mrb[0].mxu0
  %v412 = vadd.f32 0.0, %v411
  %v413 = vpop.f32.mrb[0].mxu0
  %v414 = vpop.f32.mrb[0].mxu0
  %415 = vdwg.mxu0
  %v416 = vadd.f32 %v329, %v369
  %v417 = vadd.f32 %v330, %v371
  %v418 = vadd.f32 %v331, %v410
  %v419 = vadd.f32 %v332, %v412
  %v420 = vxor.u32 %v416, 2147483648
  %v421 = vmul.f32 %v420, 1.442695
  %v422 = vpow.pop %v421
  %v423 = vadd.f32 %v422, 1.0
  %v424 = vrcp.pop %v423
  %v425 = vmul.f32 1.0, %v424
  %v426 = vxor.u32 %v417, 2147483648
  %v427 = vmul.f32 %v426, 1.442695
  %v428 = vpow.pop %v427
  %v429 = vadd.f32 %v428, 1.0
  %v430 = vrcp.pop %v429
  %v431 = vmul.f32 1.0, %v430
  %v432 = vtanh.pop %v418
  %v433 = vxor.u32 %v419, 2147483648
  %v434 = vmul.f32 %v433, 1.442695
  %v435 = vpow.pop %v434
  %v436 = vadd.f32 %v435, 1.0
  %v437 = vrcp.pop %v436
  %v438 = vmul.f32 1.0, %v437
  %v439 = vmul.f32 %v431, %v324
  %v440 = vmul.f32 %v425, %v432
  %v441 = vadd.f32 %v439, %v440
  %v442 = vtanh.pop %v441
  %v443 = vmul.f32 %v438, %v442
  %s444 = scalar_lea.vmem %s2, 8
  %445 = vst [vmem:[%s444] sm:$0xff] %v443
  %s446 = scalar_lea.vmem %s0, 64
  %v447 = vld [vmem:[%s446] sm:$0xff]
  %v448 = vld [vmem:[%s446 + $0x8] sm:$0xff]
  %v449 = vld [vmem:[%s446 + $0x10] sm:$0xff]
  %v450 = vld [vmem:[%s446 + $0x18] sm:$0xff]
  %v451 = vpack.c.bf16 %v443, %v443
  %452 = vmatprep.subr.bf16.mxu0 %v154
  %453 = vmatpush1.bf16.msra.mxu0 %v153
  %454 = vmatprep.subr.bf16.mxu0 %v158
  %455 = vmatpush1.bf16.msra.mxu0 %v157
  %456 = vmatprep.subr.bf16.mxu0 %v162
  %457 = vmatpush1.bf16.msra.mxu0 %v161
  %458 = vmatprep.subr.bf16.mxu0 %v166
  %459 = vmatpush1.bf16.msra.mxu0 %v165
  %460 = vmatprep.subr.bf16.mxu0 %v170
  %461 = vmatpush1.bf16.msra.mxu0 %v169
  %462 = vmatprep.subr.bf16.mxu0 %v174
  %463 = vmatpush1.bf16.msra.mxu0 %v173
  %464 = vmatprep.subr.bf16.mxu0 %v178
  %465 = vmatpush1.bf16.msra.mxu0 %v177
  %466 = vmatprep.subr.bf16.mxu0 %v182
  %467 = vmatpush1.bf16.msra.mxu0 %v181
  %468 = vmatprep.subr.bf16.mxu0 0
  %469 = vmatpush1.bf16.msra.mxu0 0
  %470 = vmatprep.subr.bf16.mxu0 0
  %471 = vmatpush1.bf16.msra.mxu0 0
  %472 = vmatprep.subr.bf16.mxu0 0
  %473 = vmatpush1.bf16.msra.mxu0 0
  %474 = vmatprep.subr.bf16.mxu0 0
  %475 = vmatpush1.bf16.msra.mxu0 0
  %476 = vmatprep.subr.bf16.mxu0 0
  %477 = vmatpush1.bf16.msra.mxu0 0
  %478 = vmatprep.subr.bf16.mxu0 0
  %479 = vmatpush1.bf16.msra.mxu0 0
  %480 = vmatprep.subr.bf16.mxu0 0
  %481 = vmatpush1.bf16.msra.mxu0 0
  %482 = vmatprep.subr.bf16.mxu0 0
  %483 = vmatpush1.bf16.msra.mxu0 0
  %484 = vmatprep.mubr.bf16.mxu0 0
  %485 = vmatmul.mubr.bf16.gmra.mrb[0].mxu0 %v451
  %v486 = vpop.f32.mrb[0].mxu0
  %v487 = vadd.f32 0.0, %v486
  %v488 = vpop.f32.mrb[0].mxu0
  %v489 = vadd.f32 0.0, %v488
  %v490 = vpop.f32.mrb[0].mxu0
  %v491 = vpop.f32.mrb[0].mxu0
  %492 = vdwg.mxu0
  %493 = vmatprep.subr.bf16.mxu0 %v156
  %494 = vmatpush1.bf16.msra.mxu0 %v155
  %495 = vmatprep.subr.bf16.mxu0 %v160
  %496 = vmatpush1.bf16.msra.mxu0 %v159
  %497 = vmatprep.subr.bf16.mxu0 %v164
  %498 = vmatpush1.bf16.msra.mxu0 %v163
  %499 = vmatprep.subr.bf16.mxu0 %v168
  %500 = vmatpush1.bf16.msra.mxu0 %v167
  %501 = vmatprep.subr.bf16.mxu0 %v172
  %502 = vmatpush1.bf16.msra.mxu0 %v171
  %503 = vmatprep.subr.bf16.mxu0 %v176
  %504 = vmatpush1.bf16.msra.mxu0 %v175
  %505 = vmatprep.subr.bf16.mxu0 %v180
  %506 = vmatpush1.bf16.msra.mxu0 %v179
  %507 = vmatprep.subr.bf16.mxu0 %v184
  %508 = vmatpush1.bf16.msra.mxu0 %v183
  %509 = vmatprep.subr.bf16.mxu0 0
  %510 = vmatpush1.bf16.msra.mxu0 0
  %511 = vmatprep.subr.bf16.mxu0 0
  %512 = vmatpush1.bf16.msra.mxu0 0
  %513 = vmatprep.subr.bf16.mxu0 0
  %514 = vmatpush1.bf16.msra.mxu0 0
  %515 = vmatprep.subr.bf16.mxu0 0
  %516 = vmatpush1.bf16.msra.mxu0 0
  %517 = vmatprep.subr.bf16.mxu0 0
  %518 = vmatpush1.bf16.msra.mxu0 0
  %519 = vmatprep.subr.bf16.mxu0 0
  %520 = vmatpush1.bf16.msra.mxu0 0
  %521 = vmatprep.subr.bf16.mxu0 0
  %522 = vmatpush1.bf16.msra.mxu0 0
  %523 = vmatprep.subr.bf16.mxu0 0
  %524 = vmatpush1.bf16.msra.mxu0 0
  %525 = vmatprep.mubr.bf16.mxu0 0
  %526 = vmatmul.mubr.bf16.gmra.mrb[0].mxu0 %v451
  %v527 = vpop.f32.mrb[0].mxu0
  %v528 = vadd.f32 0.0, %v527
  %v529 = vpop.f32.mrb[0].mxu0
  %v530 = vadd.f32 0.0, %v529
  %v531 = vpop.f32.mrb[0].mxu0
  %v532 = vpop.f32.mrb[0].mxu0
  %533 = vdwg.mxu0
  %v534 = vadd.f32 %v447, %v487
  %v535 = vadd.f32 %v448, %v489
  %v536 = vadd.f32 %v449, %v528
  %v537 = vadd.f32 %v450, %v530
  %v538 = vxor.u32 %v534, 2147483648
  %v539 = vmul.f32 %v538, 1.442695
  %v540 = vpow.pop %v539
  %v541 = vadd.f32 %v540, 1.0
  %v542 = vrcp.pop %v541
  %v543 = vmul.f32 1.0, %v542
  %v544 = vxor.u32 %v535, 2147483648
  %v545 = vmul.f32 %v544, 1.442695
  %v546 = vpow.pop %v545
  %v547 = vadd.f32 %v546, 1.0
  %v548 = vrcp.pop %v547
  %v549 = vmul.f32 1.0, %v548
  %v550 = vtanh.pop %v536
  %v551 = vxor.u32 %v537, 2147483648
  %v552 = vmul.f32 %v551, 1.442695
  %v553 = vpow.pop %v552
  %v554 = vadd.f32 %v553, 1.0
  %v555 = vrcp.pop %v554
  %v556 = vmul.f32 1.0, %v555
  %v557 = vmul.f32 %v549, %v441
  %v558 = vmul.f32 %v543, %v550
  %v559 = vadd.f32 %v557, %v558
  %v560 = vtanh.pop %v559
  %v561 = vmul.f32 %v556, %v560
  %s562 = scalar_lea.vmem %s2, 16
  %563 = vst [vmem:[%s562] sm:$0xff] %v561
  %s564 = scalar_lea.vmem %s0, 96
  %v565 = vld [vmem:[%s564] sm:$0xff]
  %v566 = vld [vmem:[%s564 + $0x8] sm:$0xff]
  %v567 = vld [vmem:[%s564 + $0x10] sm:$0xff]
  %v568 = vld [vmem:[%s564 + $0x18] sm:$0xff]
  %v569 = vpack.c.bf16 %v561, %v561
  %570 = vmatprep.subr.bf16.mxu0 %v154
  %571 = vmatpush1.bf16.msra.mxu0 %v153
  %572 = vmatprep.subr.bf16.mxu0 %v158
  %573 = vmatpush1.bf16.msra.mxu0 %v157
  %574 = vmatprep.subr.bf16.mxu0 %v162
  %575 = vmatpush1.bf16.msra.mxu0 %v161
  %576 = vmatprep.subr.bf16.mxu0 %v166
  %577 = vmatpush1.bf16.msra.mxu0 %v165
  %578 = vmatprep.subr.bf16.mxu0 %v170
  %579 = vmatpush1.bf16.msra.mxu0 %v169
  %580 = vmatprep.subr.bf16.mxu0 %v174
  %581 = vmatpush1.bf16.msra.mxu0 %v173
  %582 = vmatprep.subr.bf16.mxu0 %v178
  %583 = vmatpush1.bf16.msra.mxu0 %v177
  %584 = vmatprep.subr.bf16.mxu0 %v182
  %585 = vmatpush1.bf16.msra.mxu0 %v181
  %586 = vmatprep.subr.bf16.mxu0 0
  %587 = vmatpush1.bf16.msra.mxu0 0
  %588 = vmatprep.subr.bf16.mxu0 0
  %589 = vmatpush1.bf16.msra.mxu0 0
  %590 = vmatprep.subr.bf16.mxu0 0
  %591 = vmatpush1.bf16.msra.mxu0 0
  %592 = vmatprep.subr.bf16.mxu0 0
  %593 = vmatpush1.bf16.msra.mxu0 0
  %594 = vmatprep.subr.bf16.mxu0 0
  %595 = vmatpush1.bf16.msra.mxu0 0
  %596 = vmatprep.subr.bf16.mxu0 0
  %597 = vmatpush1.bf16.msra.mxu0 0
  %598 = vmatprep.subr.bf16.mxu0 0
  %599 = vmatpush1.bf16.msra.mxu0 0
  %600 = vmatprep.subr.bf16.mxu0 0
  %601 = vmatpush1.bf16.msra.mxu0 0
  %602 = vmatprep.mubr.bf16.mxu0 0
  %603 = vmatmul.mubr.bf16.gmra.mrb[0].mxu0 %v569
  %v604 = vpop.f32.mrb[0].mxu0
  %v605 = vadd.f32 0.0, %v604
  %v606 = vpop.f32.mrb[0].mxu0
  %v607 = vadd.f32 0.0, %v606
  %v608 = vpop.f32.mrb[0].mxu0
  %v609 = vpop.f32.mrb[0].mxu0
  %610 = vdwg.mxu0
  %611 = vmatprep.subr.bf16.mxu0 %v156
  %612 = vmatpush1.bf16.msra.mxu0 %v155
  %613 = vmatprep.subr.bf16.mxu0 %v160
  %614 = vmatpush1.bf16.msra.mxu0 %v159
  %615 = vmatprep.subr.bf16.mxu0 %v164
  %616 = vmatpush1.bf16.msra.mxu0 %v163
  %617 = vmatprep.subr.bf16.mxu0 %v168
  %618 = vmatpush1.bf16.msra.mxu0 %v167
  %619 = vmatprep.subr.bf16.mxu0 %v172
  %620 = vmatpush1.bf16.msra.mxu0 %v171
  %621 = vmatprep.subr.bf16.mxu0 %v176
  %622 = vmatpush1.bf16.msra.mxu0 %v175
  %623 = vmatprep.subr.bf16.mxu0 %v180
  %624 = vmatpush1.bf16.msra.mxu0 %v179
  %625 = vmatprep.subr.bf16.mxu0 %v184
  %626 = vmatpush1.bf16.msra.mxu0 %v183
  %627 = vmatprep.subr.bf16.mxu0 0
  %628 = vmatpush1.bf16.msra.mxu0 0
  %629 = vmatprep.subr.bf16.mxu0 0
  %630 = vmatpush1.bf16.msra.mxu0 0
  %631 = vmatprep.subr.bf16.mxu0 0
  %632 = vmatpush1.bf16.msra.mxu0 0
  %633 = vmatprep.subr.bf16.mxu0 0
  %634 = vmatpush1.bf16.msra.mxu0 0
  %635 = vmatprep.subr.bf16.mxu0 0
  %636 = vmatpush1.bf16.msra.mxu0 0
  %637 = vmatprep.subr.bf16.mxu0 0
  %638 = vmatpush1.bf16.msra.mxu0 0
  %639 = vmatprep.subr.bf16.mxu0 0
  %640 = vmatpush1.bf16.msra.mxu0 0
  %641 = vmatprep.subr.bf16.mxu0 0
  %642 = vmatpush1.bf16.msra.mxu0 0
  %643 = vmatprep.mubr.bf16.mxu0 0
  %644 = vmatmul.mubr.bf16.gmra.mrb[0].mxu0 %v569
  %v645 = vpop.f32.mrb[0].mxu0
  %v646 = vadd.f32 0.0, %v645
  %v647 = vpop.f32.mrb[0].mxu0
  %v648 = vadd.f32 0.0, %v647
  %v649 = vpop.f32.mrb[0].mxu0
  %v650 = vpop.f32.mrb[0].mxu0
  %651 = vdwg.mxu0
  %v652 = vadd.f32 %v565, %v605
  %v653 = vadd.f32 %v566, %v607
  %v654 = vadd.f32 %v567, %v646
  %v655 = vadd.f32 %v568, %v648
  %v656 = vxor.u32 %v652, 2147483648
  %v657 = vmul.f32 %v656, 1.442695
  %v658 = vpow.pop %v657
  %v659 = vadd.f32 %v658, 1.0
  %v660 = vrcp.pop %v659
  %v661 = vmul.f32 1.0, %v660
  %v662 = vxor.u32 %v653, 2147483648
  %v663 = vmul.f32 %v662, 1.442695
  %v664 = vpow.pop %v663
  %v665 = vadd.f32 %v664, 1.0
  %v666 = vrcp.pop %v665
  %v667 = vmul.f32 1.0, %v666
  %v668 = vtanh.pop %v654
  %v669 = vxor.u32 %v655, 2147483648
  %v670 = vmul.f32 %v669, 1.442695
  %v671 = vpow.pop %v670
  %v672 = vadd.f32 %v671, 1.0
  %v673 = vrcp.pop %v672
  %v674 = vmul.f32 1.0, %v673
  %v675 = vmul.f32 %v667, %v559
  %v676 = vmul.f32 %v661, %v668
  %v677 = vadd.f32 %v675, %v676
  %v678 = vtanh.pop %v677
  %v679 = vmul.f32 %v674, %v678
  %s680 = scalar_lea.vmem %s2, 24
  %681 = vst [vmem:[%s680] sm:$0xff] %v679
  %s682 = scalar_lea.vmem %s0, 128
  %v683 = vld [vmem:[%s682] sm:$0xff]
  %v684 = vld [vmem:[%s682 + $0x8] sm:$0xff]
  %v685 = vld [vmem:[%s682 + $0x10] sm:$0xff]
  %v686 = vld [vmem:[%s682 + $0x18] sm:$0xff]
  %v687 = vpack.c.bf16 %v679, %v679
  %688 = vmatprep.subr.bf16.mxu0 %v154
  %689 = vmatpush1.bf16.msra.mxu0 %v153
  %690 = vmatprep.subr.bf16.mxu0 %v158
  %691 = vmatpush1.bf16.msra.mxu0 %v157
  %692 = vmatprep.subr.bf16.mxu0 %v162
  %693 = vmatpush1.bf16.msra.mxu0 %v161
  %694 = vmatprep.subr.bf16.mxu0 %v166
  %695 = vmatpush1.bf16.msra.mxu0 %v165
  %696 = vmatprep.subr.bf16.mxu0 %v170
  %697 = vmatpush1.bf16.msra.mxu0 %v169
  %698 = vmatprep.subr.bf16.mxu0 %v174
  %699 = vmatpush1.bf16.msra.mxu0 %v173
  %700 = vmatprep.subr.bf16.mxu0 %v178
  %701 = vmatpush1.bf16.msra.mxu0 %v177
  %702 = vmatprep.subr.bf16.mxu0 %v182
  %703 = vmatpush1.bf16.msra.mxu0 %v181
  %704 = vmatprep.subr.bf16.mxu0 0
  %705 = vmatpush1.bf16.msra.mxu0 0
  %706 = vmatprep.subr.bf16.mxu0 0
  %707 = vmatpush1.bf16.msra.mxu0 0
  %708 = vmatprep.subr.bf16.mxu0 0
  %709 = vmatpush1.bf16.msra.mxu0 0
  %710 = vmatprep.subr.bf16.mxu0 0
  %711 = vmatpush1.bf16.msra.mxu0 0
  %712 = vmatprep.subr.bf16.mxu0 0
  %713 = vmatpush1.bf16.msra.mxu0 0
  %714 = vmatprep.subr.bf16.mxu0 0
  %715 = vmatpush1.bf16.msra.mxu0 0
  %716 = vmatprep.subr.bf16.mxu0 0
  %717 = vmatpush1.bf16.msra.mxu0 0
  %718 = vmatprep.subr.bf16.mxu0 0
  %719 = vmatpush1.bf16.msra.mxu0 0
  %720 = vmatprep.mubr.bf16.mxu0 0
  %721 = vmatmul.mubr.bf16.gmra.mrb[0].mxu0 %v687
  %v722 = vpop.f32.mrb[0].mxu0
  %v723 = vadd.f32 0.0, %v722
  %v724 = vpop.f32.mrb[0].mxu0
  %v725 = vadd.f32 0.0, %v724
  %v726 = vpop.f32.mrb[0].mxu0
  %v727 = vpop.f32.mrb[0].mxu0
  %728 = vdwg.mxu0
  %729 = vmatprep.subr.bf16.mxu0 %v156
  %730 = vmatpush1.bf16.msra.mxu0 %v155
  %731 = vmatprep.subr.bf16.mxu0 %v160
  %732 = vmatpush1.bf16.msra.mxu0 %v159
  %733 = vmatprep.subr.bf16.mxu0 %v164
  %734 = vmatpush1.bf16.msra.mxu0 %v163
  %735 = vmatprep.subr.bf16.mxu0 %v168
  %736 = vmatpush1.bf16.msra.mxu0 %v167
  %737 = vmatprep.subr.bf16.mxu0 %v172
  %738 = vmatpush1.bf16.msra.mxu0 %v171
  %739 = vmatprep.subr.bf16.mxu0 %v176
  %740 = vmatpush1.bf16.msra.mxu0 %v175
  %741 = vmatprep.subr.bf16.mxu0 %v180
  %742 = vmatpush1.bf16.msra.mxu0 %v179
  %743 = vmatprep.subr.bf16.mxu0 %v184
  %744 = vmatpush1.bf16.msra.mxu0 %v183
  %745 = vmatprep.subr.bf16.mxu0 0
  %746 = vmatpush1.bf16.msra.mxu0 0
  %747 = vmatprep.subr.bf16.mxu0 0
  %748 = vmatpush1.bf16.msra.mxu0 0
  %749 = vmatprep.subr.bf16.mxu0 0
  %750 = vmatpush1.bf16.msra.mxu0 0
  %751 = vmatprep.subr.bf16.mxu0 0
  %752 = vmatpush1.bf16.msra.mxu0 0
  %753 = vmatprep.subr.bf16.mxu0 0
  %754 = vmatpush1.bf16.msra.mxu0 0
  %755 = vmatprep.subr.bf16.mxu0 0
  %756 = vmatpush1.bf16.msra.mxu0 0
  %757 = vmatprep.subr.bf16.mxu0 0
  %758 = vmatpush1.bf16.msra.mxu0 0
  %759 = vmatprep.subr.bf16.mxu0 0
  %760 = vmatpush1.bf16.msra.mxu0 0
  %761 = vmatprep.mubr.bf16.mxu0 0
  %762 = vmatmul.mubr.bf16.gmra.mrb[0].mxu0 %v687
  %v763 = vpop.f32.mrb[0].mxu0
  %v764 = vadd.f32 0.0, %v763
  %v765 = vpop.f32.mrb[0].mxu0
  %v766 = vadd.f32 0.0, %v765
  %v767 = vpop.f32.mrb[0].mxu0
  %v768 = vpop.f32.mrb[0].mxu0
  %769 = vdwg.mxu0
  %v770 = vadd.f32 %v683, %v723
  %v771 = vadd.f32 %v684, %v725
  %v772 = vadd.f32 %v685, %v764
  %v773 = vadd.f32 %v686, %v766
  %v774 = vxor.u32 %v770, 2147483648
  %v775 = vmul.f32 %v774, 1.442695
  %v776 = vpow.pop %v775
  %v777 = vadd.f32 %v776, 1.0
  %v778 = vrcp.pop %v777
  %v779 = vmul.f32 1.0, %v778
  %v780 = vxor.u32 %v771, 2147483648
  %v781 = vmul.f32 %v780, 1.442695
  %v782 = vpow.pop %v781
  %v783 = vadd.f32 %v782, 1.0
  %v784 = vrcp.pop %v783
  %v785 = vmul.f32 1.0, %v784
  %v786 = vtanh.pop %v772
  %v787 = vxor.u32 %v773, 2147483648
  %v788 = vmul.f32 %v787, 1.442695
  %v789 = vpow.pop %v788
  %v790 = vadd.f32 %v789, 1.0
  %v791 = vrcp.pop %v790
  %v792 = vmul.f32 1.0, %v791
  %v793 = vmul.f32 %v785, %v677
  %v794 = vmul.f32 %v779, %v786
  %v795 = vadd.f32 %v793, %v794
  %v796 = vtanh.pop %v795
  %v797 = vmul.f32 %v792, %v796
  %s798 = scalar_lea.vmem %s2, 32
  %799 = vst [vmem:[%s798] sm:$0xff] %v797
  %s800 = scalar_lea.vmem %s0, 160
  %v801 = vld [vmem:[%s800] sm:$0xff]
  %v802 = vld [vmem:[%s800 + $0x8] sm:$0xff]
  %v803 = vld [vmem:[%s800 + $0x10] sm:$0xff]
  %v804 = vld [vmem:[%s800 + $0x18] sm:$0xff]
  %v805 = vpack.c.bf16 %v797, %v797
  %806 = vmatprep.subr.bf16.mxu0 %v154
  %807 = vmatpush1.bf16.msra.mxu0 %v153
  %808 = vmatprep.subr.bf16.mxu0 %v158
  %809 = vmatpush1.bf16.msra.mxu0 %v157
  %810 = vmatprep.subr.bf16.mxu0 %v162
  %811 = vmatpush1.bf16.msra.mxu0 %v161
  %812 = vmatprep.subr.bf16.mxu0 %v166
  %813 = vmatpush1.bf16.msra.mxu0 %v165
  %814 = vmatprep.subr.bf16.mxu0 %v170
  %815 = vmatpush1.bf16.msra.mxu0 %v169
  %816 = vmatprep.subr.bf16.mxu0 %v174
  %817 = vmatpush1.bf16.msra.mxu0 %v173
  %818 = vmatprep.subr.bf16.mxu0 %v178
  %819 = vmatpush1.bf16.msra.mxu0 %v177
  %820 = vmatprep.subr.bf16.mxu0 %v182
  %821 = vmatpush1.bf16.msra.mxu0 %v181
  %822 = vmatprep.subr.bf16.mxu0 0
  %823 = vmatpush1.bf16.msra.mxu0 0
  %824 = vmatprep.subr.bf16.mxu0 0
  %825 = vmatpush1.bf16.msra.mxu0 0
  %826 = vmatprep.subr.bf16.mxu0 0
  %827 = vmatpush1.bf16.msra.mxu0 0
  %828 = vmatprep.subr.bf16.mxu0 0
  %829 = vmatpush1.bf16.msra.mxu0 0
  %830 = vmatprep.subr.bf16.mxu0 0
  %831 = vmatpush1.bf16.msra.mxu0 0
  %832 = vmatprep.subr.bf16.mxu0 0
  %833 = vmatpush1.bf16.msra.mxu0 0
  %834 = vmatprep.subr.bf16.mxu0 0
  %835 = vmatpush1.bf16.msra.mxu0 0
  %836 = vmatprep.subr.bf16.mxu0 0
  %837 = vmatpush1.bf16.msra.mxu0 0
  %838 = vmatprep.mubr.bf16.mxu0 0
  %839 = vmatmul.mubr.bf16.gmra.mrb[0].mxu0 %v805
  %v840 = vpop.f32.mrb[0].mxu0
  %v841 = vadd.f32 0.0, %v840
  %v842 = vpop.f32.mrb[0].mxu0
  %v843 = vadd.f32 0.0, %v842
  %v844 = vpop.f32.mrb[0].mxu0
  %v845 = vpop.f32.mrb[0].mxu0
  %846 = vdwg.mxu0
  %847 = vmatprep.subr.bf16.mxu0 %v156
  %848 = vmatpush1.bf16.msra.mxu0 %v155
  %849 = vmatprep.subr.bf16.mxu0 %v160
  %850 = vmatpush1.bf16.msra.mxu0 %v159
  %851 = vmatprep.subr.bf16.mxu0 %v164
  %852 = vmatpush1.bf16.msra.mxu0 %v163
  %853 = vmatprep.subr.bf16.mxu0 %v168
  %854 = vmatpush1.bf16.msra.mxu0 %v167
  %855 = vmatprep.subr.bf16.mxu0 %v172
  %856 = vmatpush1.bf16.msra.mxu0 %v171
  %857 = vmatprep.subr.bf16.mxu0 %v176
  %858 = vmatpush1.bf16.msra.mxu0 %v175
  %859 = vmatprep.subr.bf16.mxu0 %v180
  %860 = vmatpush1.bf16.msra.mxu0 %v179
  %861 = vmatprep.subr.bf16.mxu0 %v184
  %862 = vmatpush1.bf16.msra.mxu0 %v183
  %863 = vmatprep.subr.bf16.mxu0 0
  %864 = vmatpush1.bf16.msra.mxu0 0
  %865 = vmatprep.subr.bf16.mxu0 0
  %866 = vmatpush1.bf16.msra.mxu0 0
  %867 = vmatprep.subr.bf16.mxu0 0
  %868 = vmatpush1.bf16.msra.mxu0 0
  %869 = vmatprep.subr.bf16.mxu0 0
  %870 = vmatpush1.bf16.msra.mxu0 0
  %871 = vmatprep.subr.bf16.mxu0 0
  %872 = vmatpush1.bf16.msra.mxu0 0
  %873 = vmatprep.subr.bf16.mxu0 0
  %874 = vmatpush1.bf16.msra.mxu0 0
  %875 = vmatprep.subr.bf16.mxu0 0
  %876 = vmatpush1.bf16.msra.mxu0 0
  %877 = vmatprep.subr.bf16.mxu0 0
  %878 = vmatpush1.bf16.msra.mxu0 0
  %879 = vmatprep.mubr.bf16.mxu0 0
  %880 = vmatmul.mubr.bf16.gmra.mrb[0].mxu0 %v805
  %v881 = vpop.f32.mrb[0].mxu0
  %v882 = vadd.f32 0.0, %v881
  %v883 = vpop.f32.mrb[0].mxu0
  %v884 = vadd.f32 0.0, %v883
  %v885 = vpop.f32.mrb[0].mxu0
  %v886 = vpop.f32.mrb[0].mxu0
  %887 = vdwg.mxu0
  %v888 = vadd.f32 %v801, %v841
  %v889 = vadd.f32 %v802, %v843
  %v890 = vadd.f32 %v803, %v882
  %v891 = vadd.f32 %v804, %v884
  %v892 = vxor.u32 %v888, 2147483648
  %v893 = vmul.f32 %v892, 1.442695
  %v894 = vpow.pop %v893
  %v895 = vadd.f32 %v894, 1.0
  %v896 = vrcp.pop %v895
  %v897 = vmul.f32 1.0, %v896
  %v898 = vxor.u32 %v889, 2147483648
  %v899 = vmul.f32 %v898, 1.442695
  %v900 = vpow.pop %v899
  %v901 = vadd.f32 %v900, 1.0
  %v902 = vrcp.pop %v901
  %v903 = vmul.f32 1.0, %v902
  %v904 = vtanh.pop %v890
  %v905 = vxor.u32 %v891, 2147483648
  %v906 = vmul.f32 %v905, 1.442695
  %v907 = vpow.pop %v906
  %v908 = vadd.f32 %v907, 1.0
  %v909 = vrcp.pop %v908
  %v910 = vmul.f32 1.0, %v909
  %v911 = vmul.f32 %v903, %v795
  %v912 = vmul.f32 %v897, %v904
  %v913 = vadd.f32 %v911, %v912
  %v914 = vtanh.pop %v913
  %v915 = vmul.f32 %v910, %v914
  %s916 = scalar_lea.vmem %s2, 40
  %917 = vst [vmem:[%s916] sm:$0xff] %v915
  %s918 = scalar_lea.vmem %s0, 192
  %v919 = vld [vmem:[%s918] sm:$0xff]
  %v920 = vld [vmem:[%s918 + $0x8] sm:$0xff]
  %v921 = vld [vmem:[%s918 + $0x10] sm:$0xff]
  %v922 = vld [vmem:[%s918 + $0x18] sm:$0xff]
  %v923 = vpack.c.bf16 %v915, %v915
  %924 = vmatprep.subr.bf16.mxu0 %v154
  %925 = vmatpush1.bf16.msra.mxu0 %v153
  %926 = vmatprep.subr.bf16.mxu0 %v158
  %927 = vmatpush1.bf16.msra.mxu0 %v157
  %928 = vmatprep.subr.bf16.mxu0 %v162
  %929 = vmatpush1.bf16.msra.mxu0 %v161
  %930 = vmatprep.subr.bf16.mxu0 %v166
  %931 = vmatpush1.bf16.msra.mxu0 %v165
  %932 = vmatprep.subr.bf16.mxu0 %v170
  %933 = vmatpush1.bf16.msra.mxu0 %v169
  %934 = vmatprep.subr.bf16.mxu0 %v174
  %935 = vmatpush1.bf16.msra.mxu0 %v173
  %936 = vmatprep.subr.bf16.mxu0 %v178
  %937 = vmatpush1.bf16.msra.mxu0 %v177
  %938 = vmatprep.subr.bf16.mxu0 %v182
  %939 = vmatpush1.bf16.msra.mxu0 %v181
  %940 = vmatprep.subr.bf16.mxu0 0
  %941 = vmatpush1.bf16.msra.mxu0 0
  %942 = vmatprep.subr.bf16.mxu0 0
  %943 = vmatpush1.bf16.msra.mxu0 0
  %944 = vmatprep.subr.bf16.mxu0 0
  %945 = vmatpush1.bf16.msra.mxu0 0
  %946 = vmatprep.subr.bf16.mxu0 0
  %947 = vmatpush1.bf16.msra.mxu0 0
  %948 = vmatprep.subr.bf16.mxu0 0
  %949 = vmatpush1.bf16.msra.mxu0 0
  %950 = vmatprep.subr.bf16.mxu0 0
  %951 = vmatpush1.bf16.msra.mxu0 0
  %952 = vmatprep.subr.bf16.mxu0 0
  %953 = vmatpush1.bf16.msra.mxu0 0
  %954 = vmatprep.subr.bf16.mxu0 0
  %955 = vmatpush1.bf16.msra.mxu0 0
  %956 = vmatprep.mubr.bf16.mxu0 0
  %957 = vmatmul.mubr.bf16.gmra.mrb[0].mxu0 %v923
  %v958 = vpop.f32.mrb[0].mxu0
  %v959 = vadd.f32 0.0, %v958
  %v960 = vpop.f32.mrb[0].mxu0
  %v961 = vadd.f32 0.0, %v960
  %v962 = vpop.f32.mrb[0].mxu0
  %v963 = vpop.f32.mrb[0].mxu0
  %964 = vdwg.mxu0
  %965 = vmatprep.subr.bf16.mxu0 %v156
  %966 = vmatpush1.bf16.msra.mxu0 %v155
  %967 = vmatprep.subr.bf16.mxu0 %v160
  %968 = vmatpush1.bf16.msra.mxu0 %v159
  %969 = vmatprep.subr.bf16.mxu0 %v164
  %970 = vmatpush1.bf16.msra.mxu0 %v163
  %971 = vmatprep.subr.bf16.mxu0 %v168
  %972 = vmatpush1.bf16.msra.mxu0 %v167
  %973 = vmatprep.subr.bf16.mxu0 %v172
  %974 = vmatpush1.bf16.msra.mxu0 %v171
  %975 = vmatprep.subr.bf16.mxu0 %v176
  %976 = vmatpush1.bf16.msra.mxu0 %v175
  %977 = vmatprep.subr.bf16.mxu0 %v180
  %978 = vmatpush1.bf16.msra.mxu0 %v179
  %979 = vmatprep.subr.bf16.mxu0 %v184
  %980 = vmatpush1.bf16.msra.mxu0 %v183
  %981 = vmatprep.subr.bf16.mxu0 0
  %982 = vmatpush1.bf16.msra.mxu0 0
  %983 = vmatprep.subr.bf16.mxu0 0
  %984 = vmatpush1.bf16.msra.mxu0 0
  %985 = vmatprep.subr.bf16.mxu0 0
  %986 = vmatpush1.bf16.msra.mxu0 0
  %987 = vmatprep.subr.bf16.mxu0 0
  %988 = vmatpush1.bf16.msra.mxu0 0
  %989 = vmatprep.subr.bf16.mxu0 0
  %990 = vmatpush1.bf16.msra.mxu0 0
  %991 = vmatprep.subr.bf16.mxu0 0
  %992 = vmatpush1.bf16.msra.mxu0 0
  %993 = vmatprep.subr.bf16.mxu0 0
  %994 = vmatpush1.bf16.msra.mxu0 0
  %995 = vmatprep.subr.bf16.mxu0 0
  %996 = vmatpush1.bf16.msra.mxu0 0
  %997 = vmatprep.mubr.bf16.mxu0 0
  %998 = vmatmul.mubr.bf16.gmra.mrb[0].mxu0 %v923
  %v999 = vpop.f32.mrb[0].mxu0
  %v1000 = vadd.f32 0.0, %v999
  %v1001 = vpop.f32.mrb[0].mxu0
  %v1002 = vadd.f32 0.0, %v1001
  %v1003 = vpop.f32.mrb[0].mxu0
  %v1004 = vpop.f32.mrb[0].mxu0
  %1005 = vdwg.mxu0
  %v1006 = vadd.f32 %v919, %v959
  %v1007 = vadd.f32 %v920, %v961
  %v1008 = vadd.f32 %v921, %v1000
  %v1009 = vadd.f32 %v922, %v1002
  %v1010 = vxor.u32 %v1006, 2147483648
  %v1011 = vmul.f32 %v1010, 1.442695
  %v1012 = vpow.pop %v1011
  %v1013 = vadd.f32 %v1012, 1.0
  %v1014 = vrcp.pop %v1013
  %v1015 = vmul.f32 1.0, %v1014
  %v1016 = vxor.u32 %v1007, 2147483648
  %v1017 = vmul.f32 %v1016, 1.442695
  %v1018 = vpow.pop %v1017
  %v1019 = vadd.f32 %v1018, 1.0
  %v1020 = vrcp.pop %v1019
  %v1021 = vmul.f32 1.0, %v1020
  %v1022 = vtanh.pop %v1008
  %v1023 = vxor.u32 %v1009, 2147483648
  %v1024 = vmul.f32 %v1023, 1.442695
  %v1025 = vpow.pop %v1024
  %v1026 = vadd.f32 %v1025, 1.0
  %v1027 = vrcp.pop %v1026
  %v1028 = vmul.f32 1.0, %v1027
  %v1029 = vmul.f32 %v1021, %v913
  %v1030 = vmul.f32 %v1015, %v1022
  %v1031 = vadd.f32 %v1029, %v1030
  %v1032 = vtanh.pop %v1031
  %v1033 = vmul.f32 %v1028, %v1032
  %s1034 = scalar_lea.vmem %s2, 48
  %1035 = vst [vmem:[%s1034] sm:$0xff] %v1033
  %s1036 = scalar_lea.vmem %s0, 224
  %v1037 = vld [vmem:[%s1036] sm:$0xff]
  %v1038 = vld [vmem:[%s1036 + $0x8] sm:$0xff]
  %v1039 = vld [vmem:[%s1036 + $0x10] sm:$0xff]
  %v1040 = vld [vmem:[%s1036 + $0x18] sm:$0xff]
  %v1041 = vpack.c.bf16 %v1033, %v1033
  %1042 = vmatprep.subr.bf16.mxu0 %v154
  %1043 = vmatpush1.bf16.msra.mxu0 %v153
  %1044 = vmatprep.subr.bf16.mxu0 %v158
  %1045 = vmatpush1.bf16.msra.mxu0 %v157
  %1046 = vmatprep.subr.bf16.mxu0 %v162
  %1047 = vmatpush1.bf16.msra.mxu0 %v161
  %1048 = vmatprep.subr.bf16.mxu0 %v166
  %1049 = vmatpush1.bf16.msra.mxu0 %v165
  %1050 = vmatprep.subr.bf16.mxu0 %v170
  %1051 = vmatpush1.bf16.msra.mxu0 %v169
  %1052 = vmatprep.subr.bf16.mxu0 %v174
  %1053 = vmatpush1.bf16.msra.mxu0 %v173
  %1054 = vmatprep.subr.bf16.mxu0 %v178
  %1055 = vmatpush1.bf16.msra.mxu0 %v177
  %1056 = vmatprep.subr.bf16.mxu0 %v182
  %1057 = vmatpush1.bf16.msra.mxu0 %v181
  %1058 = vmatprep.subr.bf16.mxu0 0
  %1059 = vmatpush1.bf16.msra.mxu0 0
  %1060 = vmatprep.subr.bf16.mxu0 0
  %1061 = vmatpush1.bf16.msra.mxu0 0
  %1062 = vmatprep.subr.bf16.mxu0 0
  %1063 = vmatpush1.bf16.msra.mxu0 0
  %1064 = vmatprep.subr.bf16.mxu0 0
  %1065 = vmatpush1.bf16.msra.mxu0 0
  %1066 = vmatprep.subr.bf16.mxu0 0
  %1067 = vmatpush1.bf16.msra.mxu0 0
  %1068 = vmatprep.subr.bf16.mxu0 0
  %1069 = vmatpush1.bf16.msra.mxu0 0
  %1070 = vmatprep.subr.bf16.mxu0 0
  %1071 = vmatpush1.bf16.msra.mxu0 0
  %1072 = vmatprep.subr.bf16.mxu0 0
  %1073 = vmatpush1.bf16.msra.mxu0 0
  %1074 = vmatprep.mubr.bf16.mxu0 0
  %1075 = vmatmul.mubr.bf16.gmra.mrb[0].mxu0 %v1041
  %v1076 = vpop.f32.mrb[0].mxu0
  %v1077 = vadd.f32 0.0, %v1076
  %v1078 = vpop.f32.mrb[0].mxu0
  %v1079 = vadd.f32 0.0, %v1078
  %v1080 = vpop.f32.mrb[0].mxu0
  %v1081 = vpop.f32.mrb[0].mxu0
  %1082 = vdwg.mxu0
  %1083 = vmatprep.subr.bf16.mxu0 %v156
  %1084 = vmatpush1.bf16.msra.mxu0 %v155
  %1085 = vmatprep.subr.bf16.mxu0 %v160
  %1086 = vmatpush1.bf16.msra.mxu0 %v159
  %1087 = vmatprep.subr.bf16.mxu0 %v164
  %1088 = vmatpush1.bf16.msra.mxu0 %v163
  %1089 = vmatprep.subr.bf16.mxu0 %v168
  %1090 = vmatpush1.bf16.msra.mxu0 %v167
  %1091 = vmatprep.subr.bf16.mxu0 %v172
  %1092 = vmatpush1.bf16.msra.mxu0 %v171
  %1093 = vmatprep.subr.bf16.mxu0 %v176
  %1094 = vmatpush1.bf16.msra.mxu0 %v175
  %1095 = vmatprep.subr.bf16.mxu0 %v180
  %1096 = vmatpush1.bf16.msra.mxu0 %v179
  %1097 = vmatprep.subr.bf16.mxu0 %v184
  %1098 = vmatpush1.bf16.msra.mxu0 %v183
  %1099 = vmatprep.subr.bf16.mxu0 0
  %1100 = vmatpush1.bf16.msra.mxu0 0
  %1101 = vmatprep.subr.bf16.mxu0 0
  %1102 = vmatpush1.bf16.msra.mxu0 0
  %1103 = vmatprep.subr.bf16.mxu0 0
  %1104 = vmatpush1.bf16.msra.mxu0 0
  %1105 = vmatprep.subr.bf16.mxu0 0
  %1106 = vmatpush1.bf16.msra.mxu0 0
  %1107 = vmatprep.subr.bf16.mxu0 0
  %1108 = vmatpush1.bf16.msra.mxu0 0
  %1109 = vmatprep.subr.bf16.mxu0 0
  %1110 = vmatpush1.bf16.msra.mxu0 0
  %1111 = vmatprep.subr.bf16.mxu0 0
  %1112 = vmatpush1.bf16.msra.mxu0 0
  %1113 = vmatprep.subr.bf16.mxu0 0
  %1114 = vmatpush1.bf16.msra.mxu0 0
  %1115 = vmatprep.mubr.bf16.mxu0 0
  %1116 = vmatmul.mubr.bf16.gmra.mrb[0].mxu0 %v1041
  %v1117 = vpop.f32.mrb[0].mxu0
  %v1118 = vadd.f32 0.0, %v1117
  %v1119 = vpop.f32.mrb[0].mxu0
  %v1120 = vadd.f32 0.0, %v1119
  %v1121 = vpop.f32.mrb[0].mxu0
  %v1122 = vpop.f32.mrb[0].mxu0
  %1123 = vdwg.mxu0
  %v1124 = vadd.f32 %v1037, %v1077
  %v1125 = vadd.f32 %v1038, %v1079
  %v1126 = vadd.f32 %v1039, %v1118
  %v1127 = vadd.f32 %v1040, %v1120
  %v1128 = vxor.u32 %v1124, 2147483648
  %v1129 = vmul.f32 %v1128, 1.442695
  %v1130 = vpow.pop %v1129
  %v1131 = vadd.f32 %v1130, 1.0
  %v1132 = vrcp.pop %v1131
  %v1133 = vmul.f32 1.0, %v1132
  %v1134 = vxor.u32 %v1125, 2147483648
  %v1135 = vmul.f32 %v1134, 1.442695
  %v1136 = vpow.pop %v1135
  %v1137 = vadd.f32 %v1136, 1.0
  %v1138 = vrcp.pop %v1137
  %v1139 = vmul.f32 1.0, %v1138
  %v1140 = vtanh.pop %v1126
  %v1141 = vxor.u32 %v1127, 2147483648
  %v1142 = vmul.f32 %v1141, 1.442695
  %v1143 = vpow.pop %v1142
  %v1144 = vadd.f32 %v1143, 1.0
  %v1145 = vrcp.pop %v1144
  %v1146 = vmul.f32 1.0, %v1145
  %v1147 = vmul.f32 %v1139, %v1031
  %v1148 = vmul.f32 %v1133, %v1140
  %v1149 = vadd.f32 %v1147, %v1148
  %v1150 = vtanh.pop %v1149
  %v1151 = vmul.f32 %v1146, %v1150
  %s1152 = scalar_lea.vmem %s2, 56
  %1153 = vst [vmem:[%s1152] sm:$0xff] %v1151
  %1154 = vst [vmem:[#allocation2] sm:$0xff] %v1151
  %1155 = vst [vmem:[#allocation3] sm:$0xff] %v1149
  // Predicated region
  $region14: #{_lambda_.4} parent=0 // pred_check
    _
  $region15: #{_lambda_.4} parent=0 // pred_check_branch
    %1157 = sbr.rel (0) target = $region17
  $region16: #{_lambda_.4} parent=0 // pred_region
    _
  $region17: #{_lambda_.4} parent=0 // pred_fallthru
    _
  // Predicated region
  $region18: #{_lambda_.4} parent=0 // pred_check
    _
  $region19: #{_lambda_.4} parent=0 // pred_check_branch
    %1159 = sbr.rel (0) target = $region21
  $region20: #{_lambda_.4} parent=0 // pred_region
    _
  $region21: #{_lambda_.4} parent=0 // pred_fallthru
    _

</llo_original>
